<compile_context>
chip_gen: v6e
topology: v6e:2x2x1
jax: 0.10.0
libtpu: 0.0.40
codegen_flags: <defaults>
</compile_context>

<pallas_src>
import functools

import jax
import jax.numpy as jnp
from jax.experimental import pallas as pl
from jax.experimental.pallas import tpu as pltpu


_SQRT_2_OVER_PI = 0.7978845608028654
_GELU_C = 0.044715
_OUT_PAD = 128          # lane-dense padding for the single HBM output write
_LN_EPS = 1e-5


def _gelu_tanh(x):
    # tanh-approximation GELU (jax.nn.gelu approximate=True); deviates from
    # nn.GELU's exact erf by <~1e-3, but moves the transcendental to the EUP.
    return 0.5 * x * (1.0 + jnp.tanh(_SQRT_2_OVER_PI * (x + _GELU_C * x * x * x)))


# ----------------------------------------------------------------------------
# Fused forward kernel.  One grid step processes `bblk` batch elements; all
# activations stay in VMEM/vregs, all matmuls use bf16 operands + f32 accum.
# ----------------------------------------------------------------------------
def _fused_gsnet_kernel(
        x_ref,       # (bblk, J, cin)     f32
        adjb_ref,    # (bblk, J, J)       bf16  (1-beta)*A_hat, pre-broadcast
        in_w_ref,    # (cin, hid)         bf16
        lw_ref,      # (L, 2, hid, hid)   bf16  [w1, w2] per ResGraphConv layer
        lv_ref,      # (L, 4, hid)        f32   [b1, ln_gamma, ln_beta, b2]
        nlw_ref,     # (3, hid, inter)    bf16  [wg, wtheta, wphi]
        nlv_ref,     # (3, inter)         f32   [bg, btheta, bphi]
        wo_ref,      # (inter, hid)       bf16  non-local output projection
        hv_ref,      # (3, hid)           f32   [in_b, nl_bn_scale, nl_bn_shift]
        ow_ref,      # (hid, 128)         bf16  output projection (lane-padded)
        ob_ref,      # (1, 128)           f32   output bias (lane-padded)
        o_ref,       # (bblk, J, 128)     f32
        *, beta):
    bblk, J, _ = adjb_ref.shape
    num_layers = lw_ref.shape[0]

    adjb = adjb_ref[...]                     # bf16, already scaled by (1-beta)
    hv = hv_ref[...]                         # (3, hid) f32

    def gconv(h, x0, w_bf16, b):
        # GSNetGraphConv (GCNII-style, guessed):
        #   y = ((1-beta) * A_hat @ h + beta * x0) @ W + b
        # (1-beta) is folded into adjb wrapper-side. Adjacency aggregation is a
        # small per-batch batched matmul (no block-diagonal N^2 operand).
        c = h.shape[-1]
        h3 = h.astype(jnp.bfloat16).reshape(bblk, J, c)
        agg = jnp.einsum('bjk,bkc->bjc', adjb, h3,
                         preferred_element_type=jnp.float32)
        mix = agg.reshape(h.shape) + beta * x0                # f32
        return jnp.dot(mix.astype(jnp.bfloat16), w_bf16,
                       preferred_element_type=jnp.float32) + b

    def layer_norm(y, g, b):
        # one-pass variance: E[x^2] - E[x]^2 (single extra reduce, no subtract)
        mu = jnp.mean(y, axis=-1, keepdims=True)
        msq = jnp.mean(y * y, axis=-1, keepdims=True)
        var = msq - mu * mu
        return (y - mu) * jax.lax.rsqrt(var + _LN_EPS) * g + b

    # --- gconv_input: GraphConvBlockII(cin -> hid), x0 = x, then GELU ---------
    x = x_ref[...].reshape(bblk * J, -1)                      # (N, cin) f32
    out = _gelu_tanh(gconv(x, x, in_w_ref[...], hv[0:1, :]))
    x_out = out                                               # residual for gconv_output

    # --- gconv_layers: num_layers x ResGraphConv(hid -> hid), static unroll ---
    for l in range(num_layers):
        lv = lv_ref[l]                                        # (4, hid) f32
        residual = out
        h = gconv(out, residual, lw_ref[l, 0, :, :], lv[0:1, :])     # GraphConvBlockI
        h = layer_norm(h, lv[1:2, :], lv[2:3, :])
        y = _gelu_tanh(gconv(h, residual, lw_ref[l, 1, :, :], lv[3:4, :]))  # BlockII
        out = residual + y

    # --- non-local block over joints, attention PER BATCH ELEMENT -------------
    # TODO(synk): canonical Wang-et-al NONLocalBlock2D with eval-mode BN folded;
    # swap in the exact reference formula if it becomes available.
    nlv = nlv_ref[...]                                        # (3, inter) f32
    out_bf = out.astype(jnp.bfloat16)
    g_ = jnp.dot(out_bf, nlw_ref[0], preferred_element_type=jnp.float32) + nlv[0:1, :]
    th = jnp.dot(out_bf, nlw_ref[1], preferred_element_type=jnp.float32) + nlv[1:2, :]
    ph = jnp.dot(out_bf, nlw_ref[2], preferred_element_type=jnp.float32) + nlv[2:3, :]
    inter = g_.shape[-1]
    g3 = g_.astype(jnp.bfloat16).reshape(bblk, J, inter)
    th3 = th.astype(jnp.bfloat16).reshape(bblk, J, inter)
    ph3 = ph.astype(jnp.bfloat16).reshape(bblk, J, inter)
    f = jnp.einsum('bjd,bkd->bjk', th3, ph3,
                   preferred_element_type=jnp.float32)        # (bblk, J, J) f32
    f = f - jnp.max(f, axis=-1, keepdims=True)                # softmax in f32
    e = jnp.exp(f)
    att = e * pl.reciprocal(jnp.sum(e, axis=-1, keepdims=True), approx=True)
    y3 = jnp.einsum('bjk,bkd->bjd', att.astype(jnp.bfloat16), g3,
                    preferred_element_type=jnp.float32)       # (bblk, J, inter)
    wy = jnp.dot(y3.reshape(bblk * J, inter).astype(jnp.bfloat16), wo_ref[...],
                 preferred_element_type=jnp.float32)          # (N, hid)
    out = wy * hv[1:2, :] + hv[2:3, :] + out                  # folded eval-BN + residual

    # --- gconv_output: GSNetGraphConv(hid -> 3), x0 = x_out, padded to 128 ----
    y_out = gconv(out, x_out, ow_ref[...], ob_ref[...])       # (N, 128) lane-dense
    o_ref[...] = y_out.reshape(bblk, J, _OUT_PAD)


# ----------------------------------------------------------------------------
# Wrapper: one pallas_call over batch blocks.
# ----------------------------------------------------------------------------
def _pick_bblk(batch, J, target_rows=256, max_rows=1024):
    divisors = [d for d in range(1, batch + 1) if batch % d == 0]
    # Prefer >= 2 grid steps so both v7x TensorCores get work, while keeping
    # rows-per-step (bblk*J) large enough to amortize per-step overhead.
    multi = [d for d in divisors if batch // d >= 2 and d * J <= max_rows]
    if multi:
        small = [d for d in multi if d * J <= target_rows]
        return max(small) if small else min(multi)
    ok = [d for d in divisors if d * J <= max_rows]
    return max(ok) if ok else 1


def gsnet_gcn_forward(x, params, *, beta, bblk=None):
    # x: (B, 2, J, 1) -- matches the PyTorch input before .squeeze()
    B, cin, J, _ = x.shape
    hid = params["in_w"].shape[1]
    cout = params["out_w"].shape[1]
    inter = params["nl"]["wg"].shape[1]

    if bblk is None:
        bblk = _pick_bblk(B, J)
    assert B % bblk == 0
    nblk = B // bblk

    # x.squeeze().permute(0, 2, 1)  ->  (B, J, cin)
    xj = jnp.transpose(jnp.squeeze(x, axis=-1), (0, 2, 1)).astype(jnp.float32)

    # (1 - beta) folded into the normalized adjacency; broadcast per batch block
    # and cast to bf16 wrapper-side (tiny operand, no kron / N^2 matrix).
    adjb = jnp.broadcast_to(((1.0 - beta) * params["adj"]).astype(jnp.bfloat16),
                            (bblk, J, J))

    # Stacked per-layer weights / vectors so the 4-layer loop runs in-kernel
    # with few operands (fewer DMA descriptors per grid step).
    lw = params["layers"]
    lw_stack = jnp.stack([jnp.stack([lp["w1"], lp["w2"]]) for lp in lw]
                         ).astype(jnp.bfloat16)                              # (L,2,h,h)
    lv_stack = jnp.stack([jnp.stack([lp["b1"], lp["ln_g"], lp["ln_b"], lp["b2"]])
                          for lp in lw]).astype(jnp.float32)                 # (L,4,h)

    nl = params["nl"]
    nlw = jnp.stack([nl["wg"], nl["wt"], nl["wp"]]).astype(jnp.bfloat16)     # (3,h,i)
    nlv = jnp.stack([nl["bg"], nl["bt"], nl["bp"]]).astype(jnp.float32)      # (3,i)
    wo_bf = nl["wo"].astype(jnp.bfloat16)                                    # (i,h)
    in_w_bf = params["in_w"].astype(jnp.bfloat16)                            # (cin,h)

    # Non-local W-conv bias + eval-mode BatchNorm folded to scale/shift.
    nl_scale = nl["bn_gamma"] * jax.lax.rsqrt(nl["bn_var"] + 1e-5)
    nl_shift = (nl["bo"] - nl["bn_mean"]) * nl_scale + nl["bn_beta"]
    hv = jnp.stack([params["in_b"], nl_scale, nl_shift]).astype(jnp.float32)  # (3,h)

    # Output projection zero-padded to 128 lanes (lane-dense final store).
    ow = jnp.zeros((hid, _OUT_PAD), jnp.bfloat16).at[:, :cout].set(
        params["out_w"].astype(jnp.bfloat16))
    ob = jnp.zeros((1, _OUT_PAD), jnp.float32).at[0, :cout].set(params["out_b"])

    def full(arr):
        nd = arr.ndim
        return pl.BlockSpec(arr.shape, lambda i, _nd=nd: (0,) * _nd)

    kernel = functools.partial(_fused_gsnet_kernel, beta=float(beta))

    y = pl.pallas_call(
        kernel,
        out_shape=jax.ShapeDtypeStruct((B, J, _OUT_PAD), jnp.float32),
        grid=(nblk,),
        in_specs=[
            pl.BlockSpec((bblk, J, cin), lambda i: (i, 0, 0)),   # x (batch-blocked)
            full(adjb),                                          # (bblk,J,J) adjacency
            full(in_w_bf),                                       # gconv_input weight
            full(lw_stack), full(lv_stack),                      # ResGraphConv weights
            full(nlw), full(nlv), full(wo_bf),                   # non-local block
            full(hv),                                            # in_b / BN scale,shift
            full(ow), full(ob),                                  # gconv_output (padded)
        ],
        out_specs=pl.BlockSpec((bblk, J, _OUT_PAD), lambda i: (i, 0, 0)),
        compiler_params=pltpu.CompilerParams(dimension_semantics=("parallel",)),
    )(xj, adjb, in_w_bf, lw_stack, lv_stack, nlw, nlv, wo_bf, hv, ow, ob)

    # (B, J, 128) -> take :cout -> permute(0,2,1).unsqueeze(2).unsqueeze(4)
    # TODO(synk): at large B fuse this slice/transpose into the consumer to
    # avoid re-reading the 128-lane padded buffer from HBM.
    y = y[:, :, :cout]
    return jnp.transpose(y, (0, 2, 1))[:, :, None, :, None]


# ----------------------------------------------------------------------------
# Deterministic parameter construction.
# ----------------------------------------------------------------------------
def build_adj(J):
    a = jnp.eye(J, dtype=jnp.float32)
    idx = jnp.arange(J - 1)
    a = a.at[idx, idx + 1].set(1.0)
    a = a.at[idx + 1, idx].set(1.0)
    deg = jnp.sum(a, axis=-1)
    d = jax.lax.rsqrt(deg)
    return a * d[:, None] * d[None, :]


def init_params(key, J, hid, coords_dim=(2, 3), num_layers=4):
    inter = hid // 2
    keys = jax.random.split(key, 64)
    it = iter(keys)

    def w(shape, scale=0.1):
        return (scale * jax.random.normal(next(it), shape)).astype(jnp.float32)

    params = {"adj": build_adj(J)}
    params["in_w"] = w((coords_dim[0], hid))
    params["in_b"] = w((hid,), 0.01)
    layers = []
    for _ in range(num_layers):
        layers.append(dict(
            w1=w((hid, hid)), b1=w((hid,), 0.01),
            ln_g=jnp.ones((hid,), jnp.float32), ln_b=jnp.zeros((hid,), jnp.float32),
            w2=w((hid, hid)), b2=w((hid,), 0.01)))
    params["layers"] = layers
    # non-local 1x1 conv weights stored pre-transposed as (in_features, out_features).
    params["nl"] = dict(
        wg=w((hid, inter)), bg=w((inter,), 0.01),
        wt=w((hid, inter)), bt=w((inter,), 0.01),
        wp=w((hid, inter)), bp=w((inter,), 0.01),
        wo=w((inter, hid)), bo=w((hid,), 0.01),
        bn_gamma=1.0 + w((hid,), 0.1), bn_beta=w((hid,), 0.01),
        bn_mean=jnp.zeros((hid,), jnp.float32), bn_var=jnp.ones((hid,), jnp.float32))
    params["out_w"] = w((hid, coords_dim[1]))
    params["out_b"] = w((coords_dim[1],), 0.01)
    return params


if __name__ == "__main__":
    B, J, HID = 2, 16, 32
    key = jax.random.PRNGKey(0)
    kx, kp = jax.random.split(key)
    x = jax.random.normal(kx, (B, 2, J, 1), dtype=jnp.float32)
    params = init_params(kp, J, HID)

    fwd = jax.jit(functools.partial(gsnet_gcn_forward, beta=0.3))
    out = fwd(x, params)
    jax.block_until_ready(out)
    assert out.shape == (B, 3, 1, J, 1), out.shape
    assert bool(jnp.all(jnp.isfinite(out)))
    print("KERNEL_OK")
</pallas_src>

<mosaic_0001>
module attributes {stable_mosaic.version = 11 : i64} {
  func.func @_fused_gsnet_kernel(%arg0: i32, %arg1: memref<1x16x2xf32, #tpu.memory_space<vmem>>, %arg2: memref<1x16x16xbf16, #tpu.memory_space<vmem>>, %arg3: memref<2x32xbf16, #tpu.memory_space<vmem>>, %arg4: memref<4x2x32x32xbf16, #tpu.memory_space<vmem>>, %arg5: memref<4x4x32xf32, #tpu.memory_space<vmem>>, %arg6: memref<3x32x16xbf16, #tpu.memory_space<vmem>>, %arg7: memref<3x16xf32, #tpu.memory_space<vmem>>, %arg8: memref<16x32xbf16, #tpu.memory_space<vmem>>, %arg9: memref<3x32xf32, #tpu.memory_space<vmem>>, %arg10: memref<32x128xbf16, #tpu.memory_space<vmem>>, %arg11: memref<1x128xf32, #tpu.memory_space<vmem>>, %arg12: memref<1x16x128xf32, #tpu.memory_space<vmem>>) attributes {dimension_semantics = [#tpu.dimension_semantics<parallel>], iteration_bounds = array<i64: 2>, scalar_prefetch = 0 : i64, scratch_operands = 0 : i64, tpu.core_type = #tpu.core_type<tc>, window_params = [{transform_indices = @transform_0, window_bounds = array<i64: 1, 16, 2>}, {pipeline_mode = #tpu.pipeline_mode<synchronous>, transform_indices = @transform_1, window_bounds = array<i64: 1, 16, 16>}, {pipeline_mode = #tpu.pipeline_mode<synchronous>, transform_indices = @transform_2, window_bounds = array<i64: 2, 32>}, {pipeline_mode = #tpu.pipeline_mode<synchronous>, transform_indices = @transform_3, window_bounds = array<i64: 4, 2, 32, 32>}, {pipeline_mode = #tpu.pipeline_mode<synchronous>, transform_indices = @transform_4, window_bounds = array<i64: 4, 4, 32>}, {pipeline_mode = #tpu.pipeline_mode<synchronous>, transform_indices = @transform_5, window_bounds = array<i64: 3, 32, 16>}, {pipeline_mode = #tpu.pipeline_mode<synchronous>, transform_indices = @transform_6, window_bounds = array<i64: 3, 16>}, {pipeline_mode = #tpu.pipeline_mode<synchronous>, transform_indices = @transform_7, window_bounds = array<i64: 16, 32>}, {pipeline_mode = #tpu.pipeline_mode<synchronous>, transform_indices = @transform_8, window_bounds = array<i64: 3, 32>}, {pipeline_mode = #tpu.pipeline_mode<synchronous>, transform_indices = @transform_9, window_bounds = array<i64: 32, 128>}, {pipeline_mode = #tpu.pipeline_mode<synchronous>, transform_indices = @transform_10, window_bounds = array<i64: 1, 128>}, {transform_indices = @transform_11, window_bounds = array<i64: 1, 16, 128>}]} {
    %c0 = arith.constant 0 : index
    %c0_0 = arith.constant 0 : index
    %c0_1 = arith.constant 0 : index
    %0 = vector.load %arg2[%c0, %c0_0, %c0_1] : memref<1x16x16xbf16, #tpu.memory_space<vmem>>, vector<1x16x16xbf16>
    %c0_2 = arith.constant 0 : index
    %c0_3 = arith.constant 0 : index
    %1 = vector.load %arg9[%c0_2, %c0_3] : memref<3x32xf32, #tpu.memory_space<vmem>>, vector<3x32xf32>
    %c0_4 = arith.constant 0 : index
    %c0_5 = arith.constant 0 : index
    %c0_6 = arith.constant 0 : index
    %2 = vector.load %arg1[%c0_4, %c0_5, %c0_6] : memref<1x16x2xf32, #tpu.memory_space<vmem>>, vector<1x16x2xf32>
    %3 = vector.shape_cast %2 : vector<1x16x2xf32> to vector<16x2xf32>
    %c0_7 = arith.constant 0 : index
    %c0_8 = arith.constant 0 : index
    %4 = vector.load %arg3[%c0_7, %c0_8] : memref<2x32xbf16, #tpu.memory_space<vmem>>, vector<2x32xbf16>
    %5 = vector.extract_strided_slice %1 {offsets = [0, 0], sizes = [1, 32], strides = [1, 1]} : vector<3x32xf32> to vector<1x32xf32>
    %6 = arith.truncf %3 : vector<16x2xf32> to vector<16x2xbf16>
    %7 = vector.shape_cast %6 : vector<16x2xbf16> to vector<1x16x2xbf16>
    "tpu.trace_start"() <{level = 10 : i32, message = "bjk,bkc->bjc"}> : () -> ()
    %cst = arith.constant dense<0.000000e+00> : vector<1x16x2xf32>
    %8 = tpu.matmul %0, %7, %cst {dimension_numbers = #tpu.dot_dimension_numbers<[2], [1], [1], [2], [0, 0, 0, 1, 1, 2], [0], [0]>} : vector<1x16x16xbf16>, vector<1x16x2xbf16>, vector<1x16x2xf32> -> vector<1x16x2xf32>
    "tpu.trace_stop"() : () -> ()
    %9 = vector.shape_cast %8 : vector<1x16x2xf32> to vector<16x2xf32>
    %cst_9 = arith.constant 3.000000e-01 : f32
    %10 = vector.broadcast %cst_9 : f32 to vector<16x2xf32>
    %11 = arith.mulf %10, %3 : vector<16x2xf32>
    %12 = arith.addf %9, %11 : vector<16x2xf32>
    %13 = arith.truncf %12 : vector<16x2xf32> to vector<16x2xbf16>
    %cst_10 = arith.constant dense<0.000000e+00> : vector<16x32xf32>
    %14 = tpu.matmul %13, %4, %cst_10 {dimension_numbers = #tpu.dot_dimension_numbers<[1], [0], [0], [1], [0, 0, 1, 1], [], []>} : vector<16x2xbf16>, vector<2x32xbf16>, vector<16x32xf32> -> vector<16x32xf32>
    %15 = vector.broadcast %5 : vector<1x32xf32> to vector<16x32xf32>
    %16 = arith.addf %14, %15 : vector<16x32xf32>
    %cst_11 = arith.constant 5.000000e-01 : f32
    %17 = vector.broadcast %cst_11 : f32 to vector<16x32xf32>
    %18 = arith.mulf %17, %16 : vector<16x32xf32>
    %cst_12 = arith.constant 4.471500e-02 : f32
    %19 = vector.broadcast %cst_12 : f32 to vector<16x32xf32>
    %20 = arith.mulf %19, %16 : vector<16x32xf32>
    %21 = arith.mulf %20, %16 : vector<16x32xf32>
    %22 = arith.mulf %21, %16 : vector<16x32xf32>
    %23 = arith.addf %16, %22 : vector<16x32xf32>
    %cst_13 = arith.constant 0.797884583 : f32
    %24 = vector.broadcast %cst_13 : f32 to vector<16x32xf32>
    %25 = arith.mulf %24, %23 : vector<16x32xf32>
    %26 = math.tanh %25 : vector<16x32xf32>
    %cst_14 = arith.constant 1.000000e+00 : f32
    %27 = vector.broadcast %cst_14 : f32 to vector<16x32xf32>
    %28 = arith.addf %27, %26 : vector<16x32xf32>
    %29 = arith.mulf %18, %28 : vector<16x32xf32>
    %c0_15 = arith.constant 0 : index
    %c0_16 = arith.constant 0 : index
    %c0_17 = arith.constant 0 : index
    %30 = vector.load %arg5[%c0_15, %c0_16, %c0_17] : memref<4x4x32xf32, #tpu.memory_space<vmem>>, vector<1x4x32xf32>
    %31 = vector.shape_cast %30 : vector<1x4x32xf32> to vector<4x32xf32>
    %c0_18 = arith.constant 0 : index
    %c0_19 = arith.constant 0 : index
    %c0_20 = arith.constant 0 : index
    %c0_21 = arith.constant 0 : index
    %32 = vector.load %arg4[%c0_18, %c0_19, %c0_20, %c0_21] : memref<4x2x32x32xbf16, #tpu.memory_space<vmem>>, vector<1x1x32x32xbf16>
    %33 = vector.shape_cast %32 : vector<1x1x32x32xbf16> to vector<32x32xbf16>
    %34 = vector.extract_strided_slice %31 {offsets = [0, 0], sizes = [1, 32], strides = [1, 1]} : vector<4x32xf32> to vector<1x32xf32>
    %35 = arith.truncf %29 : vector<16x32xf32> to vector<16x32xbf16>
    %36 = vector.shape_cast %35 : vector<16x32xbf16> to vector<1x16x32xbf16>
    "tpu.trace_start"() <{level = 10 : i32, message = "bjk,bkc->bjc"}> : () -> ()
    %cst_22 = arith.constant dense<0.000000e+00> : vector<1x16x32xf32>
    %37 = tpu.matmul %0, %36, %cst_22 {dimension_numbers = #tpu.dot_dimension_numbers<[2], [1], [1], [2], [0, 0, 0, 1, 1, 2], [0], [0]>} : vector<1x16x16xbf16>, vector<1x16x32xbf16>, vector<1x16x32xf32> -> vector<1x16x32xf32>
    "tpu.trace_stop"() : () -> ()
    %38 = vector.shape_cast %37 : vector<1x16x32xf32> to vector<16x32xf32>
    %cst_23 = arith.constant 3.000000e-01 : f32
    %39 = vector.broadcast %cst_23 : f32 to vector<16x32xf32>
    %40 = arith.mulf %39, %29 : vector<16x32xf32>
    %41 = arith.addf %38, %40 : vector<16x32xf32>
    %42 = arith.truncf %41 : vector<16x32xf32> to vector<16x32xbf16>
    %cst_24 = arith.constant dense<0.000000e+00> : vector<16x32xf32>
    %43 = tpu.matmul %42, %33, %cst_24 {dimension_numbers = #tpu.dot_dimension_numbers<[1], [0], [0], [1], [0, 0, 1, 1], [], []>} : vector<16x32xbf16>, vector<32x32xbf16>, vector<16x32xf32> -> vector<16x32xf32>
    %44 = vector.broadcast %34 : vector<1x32xf32> to vector<16x32xf32>
    %45 = arith.addf %43, %44 : vector<16x32xf32>
    %46 = vector.extract_strided_slice %31 {offsets = [1, 0], sizes = [1, 32], strides = [1, 1]} : vector<4x32xf32> to vector<1x32xf32>
    %47 = vector.extract_strided_slice %31 {offsets = [2, 0], sizes = [1, 32], strides = [1, 1]} : vector<4x32xf32> to vector<1x32xf32>
    %cst_25 = arith.constant dense<0.000000e+00> : vector<16xf32>
    %48 = vector.multi_reduction <add>, %45, %cst_25 [1] : vector<16x32xf32> to vector<16xf32>
    %49 = vector.shape_cast %48 : vector<16xf32> to vector<16x1xf32>
    %cst_26 = arith.constant 3.200000e+01 : f32
    %50 = vector.broadcast %cst_26 : f32 to vector<16x1xf32>
    %51 = arith.divf %49, %50 : vector<16x1xf32>
    %52 = arith.mulf %45, %45 : vector<16x32xf32>
    %cst_27 = arith.constant dense<0.000000e+00> : vector<16xf32>
    %53 = vector.multi_reduction <add>, %52, %cst_27 [1] : vector<16x32xf32> to vector<16xf32>
    %54 = vector.shape_cast %53 : vector<16xf32> to vector<16x1xf32>
    %cst_28 = arith.constant 3.200000e+01 : f32
    %55 = vector.broadcast %cst_28 : f32 to vector<16x1xf32>
    %56 = arith.divf %54, %55 : vector<16x1xf32>
    %57 = arith.mulf %51, %51 : vector<16x1xf32>
    %58 = arith.subf %56, %57 : vector<16x1xf32>
    %59 = vector.broadcast %51 : vector<16x1xf32> to vector<16x32xf32>
    %60 = arith.subf %45, %59 : vector<16x32xf32>
    %cst_29 = arith.constant 9.99999974E-6 : f32
    %61 = vector.broadcast %cst_29 : f32 to vector<16x1xf32>
    %62 = arith.addf %58, %61 : vector<16x1xf32>
    %63 = math.rsqrt %62 : vector<16x1xf32>
    %64 = vector.broadcast %63 : vector<16x1xf32> to vector<16x32xf32>
    %65 = arith.mulf %60, %64 : vector<16x32xf32>
    %66 = vector.broadcast %46 : vector<1x32xf32> to vector<16x32xf32>
    %67 = arith.mulf %65, %66 : vector<16x32xf32>
    %68 = vector.broadcast %47 : vector<1x32xf32> to vector<16x32xf32>
    %69 = arith.addf %67, %68 : vector<16x32xf32>
    %c0_30 = arith.constant 0 : index
    %c1 = arith.constant 1 : index
    %c0_31 = arith.constant 0 : index
    %c0_32 = arith.constant 0 : index
    %70 = vector.load %arg4[%c0_30, %c1, %c0_31, %c0_32] : memref<4x2x32x32xbf16, #tpu.memory_space<vmem>>, vector<1x1x32x32xbf16>
    %71 = vector.shape_cast %70 : vector<1x1x32x32xbf16> to vector<32x32xbf16>
    %72 = vector.extract_strided_slice %31 {offsets = [3, 0], sizes = [1, 32], strides = [1, 1]} : vector<4x32xf32> to vector<1x32xf32>
    %73 = arith.truncf %69 : vector<16x32xf32> to vector<16x32xbf16>
    %74 = vector.shape_cast %73 : vector<16x32xbf16> to vector<1x16x32xbf16>
    "tpu.trace_start"() <{level = 10 : i32, message = "bjk,bkc->bjc"}> : () -> ()
    %cst_33 = arith.constant dense<0.000000e+00> : vector<1x16x32xf32>
    %75 = tpu.matmul %0, %74, %cst_33 {dimension_numbers = #tpu.dot_dimension_numbers<[2], [1], [1], [2], [0, 0, 0, 1, 1, 2], [0], [0]>} : vector<1x16x16xbf16>, vector<1x16x32xbf16>, vector<1x16x32xf32> -> vector<1x16x32xf32>
    "tpu.trace_stop"() : () -> ()
    %76 = vector.shape_cast %75 : vector<1x16x32xf32> to vector<16x32xf32>
    %cst_34 = arith.constant 3.000000e-01 : f32
    %77 = vector.broadcast %cst_34 : f32 to vector<16x32xf32>
    %78 = arith.mulf %77, %29 : vector<16x32xf32>
    %79 = arith.addf %76, %78 : vector<16x32xf32>
    %80 = arith.truncf %79 : vector<16x32xf32> to vector<16x32xbf16>
    %cst_35 = arith.constant dense<0.000000e+00> : vector<16x32xf32>
    %81 = tpu.matmul %80, %71, %cst_35 {dimension_numbers = #tpu.dot_dimension_numbers<[1], [0], [0], [1], [0, 0, 1, 1], [], []>} : vector<16x32xbf16>, vector<32x32xbf16>, vector<16x32xf32> -> vector<16x32xf32>
    %82 = vector.broadcast %72 : vector<1x32xf32> to vector<16x32xf32>
    %83 = arith.addf %81, %82 : vector<16x32xf32>
    %cst_36 = arith.constant 5.000000e-01 : f32
    %84 = vector.broadcast %cst_36 : f32 to vector<16x32xf32>
    %85 = arith.mulf %84, %83 : vector<16x32xf32>
    %cst_37 = arith.constant 4.471500e-02 : f32
    %86 = vector.broadcast %cst_37 : f32 to vector<16x32xf32>
    %87 = arith.mulf %86, %83 : vector<16x32xf32>
    %88 = arith.mulf %87, %83 : vector<16x32xf32>
    %89 = arith.mulf %88, %83 : vector<16x32xf32>
    %90 = arith.addf %83, %89 : vector<16x32xf32>
    %cst_38 = arith.constant 0.797884583 : f32
    %91 = vector.broadcast %cst_38 : f32 to vector<16x32xf32>
    %92 = arith.mulf %91, %90 : vector<16x32xf32>
    %93 = math.tanh %92 : vector<16x32xf32>
    %cst_39 = arith.constant 1.000000e+00 : f32
    %94 = vector.broadcast %cst_39 : f32 to vector<16x32xf32>
    %95 = arith.addf %94, %93 : vector<16x32xf32>
    %96 = arith.mulf %85, %95 : vector<16x32xf32>
    %97 = arith.addf %29, %96 : vector<16x32xf32>
    %c1_40 = arith.constant 1 : index
    %c0_41 = arith.constant 0 : index
    %c0_42 = arith.constant 0 : index
    %98 = vector.load %arg5[%c1_40, %c0_41, %c0_42] : memref<4x4x32xf32, #tpu.memory_space<vmem>>, vector<1x4x32xf32>
    %99 = vector.shape_cast %98 : vector<1x4x32xf32> to vector<4x32xf32>
    %c1_43 = arith.constant 1 : index
    %c0_44 = arith.constant 0 : index
    %c0_45 = arith.constant 0 : index
    %c0_46 = arith.constant 0 : index
    %100 = vector.load %arg4[%c1_43, %c0_44, %c0_45, %c0_46] : memref<4x2x32x32xbf16, #tpu.memory_space<vmem>>, vector<1x1x32x32xbf16>
    %101 = vector.shape_cast %100 : vector<1x1x32x32xbf16> to vector<32x32xbf16>
    %102 = vector.extract_strided_slice %99 {offsets = [0, 0], sizes = [1, 32], strides = [1, 1]} : vector<4x32xf32> to vector<1x32xf32>
    %103 = arith.truncf %97 : vector<16x32xf32> to vector<16x32xbf16>
    %104 = vector.shape_cast %103 : vector<16x32xbf16> to vector<1x16x32xbf16>
    "tpu.trace_start"() <{level = 10 : i32, message = "bjk,bkc->bjc"}> : () -> ()
    %cst_47 = arith.constant dense<0.000000e+00> : vector<1x16x32xf32>
    %105 = tpu.matmul %0, %104, %cst_47 {dimension_numbers = #tpu.dot_dimension_numbers<[2], [1], [1], [2], [0, 0, 0, 1, 1, 2], [0], [0]>} : vector<1x16x16xbf16>, vector<1x16x32xbf16>, vector<1x16x32xf32> -> vector<1x16x32xf32>
    "tpu.trace_stop"() : () -> ()
    %106 = vector.shape_cast %105 : vector<1x16x32xf32> to vector<16x32xf32>
    %cst_48 = arith.constant 3.000000e-01 : f32
    %107 = vector.broadcast %cst_48 : f32 to vector<16x32xf32>
    %108 = arith.mulf %107, %97 : vector<16x32xf32>
    %109 = arith.addf %106, %108 : vector<16x32xf32>
    %110 = arith.truncf %109 : vector<16x32xf32> to vector<16x32xbf16>
    %cst_49 = arith.constant dense<0.000000e+00> : vector<16x32xf32>
    %111 = tpu.matmul %110, %101, %cst_49 {dimension_numbers = #tpu.dot_dimension_numbers<[1], [0], [0], [1], [0, 0, 1, 1], [], []>} : vector<16x32xbf16>, vector<32x32xbf16>, vector<16x32xf32> -> vector<16x32xf32>
    %112 = vector.broadcast %102 : vector<1x32xf32> to vector<16x32xf32>
    %113 = arith.addf %111, %112 : vector<16x32xf32>
    %114 = vector.extract_strided_slice %99 {offsets = [1, 0], sizes = [1, 32], strides = [1, 1]} : vector<4x32xf32> to vector<1x32xf32>
    %115 = vector.extract_strided_slice %99 {offsets = [2, 0], sizes = [1, 32], strides = [1, 1]} : vector<4x32xf32> to vector<1x32xf32>
    %cst_50 = arith.constant dense<0.000000e+00> : vector<16xf32>
    %116 = vector.multi_reduction <add>, %113, %cst_50 [1] : vector<16x32xf32> to vector<16xf32>
    %117 = vector.shape_cast %116 : vector<16xf32> to vector<16x1xf32>
    %cst_51 = arith.constant 3.200000e+01 : f32
    %118 = vector.broadcast %cst_51 : f32 to vector<16x1xf32>
    %119 = arith.divf %117, %118 : vector<16x1xf32>
    %120 = arith.mulf %113, %113 : vector<16x32xf32>
    %cst_52 = arith.constant dense<0.000000e+00> : vector<16xf32>
    %121 = vector.multi_reduction <add>, %120, %cst_52 [1] : vector<16x32xf32> to vector<16xf32>
    %122 = vector.shape_cast %121 : vector<16xf32> to vector<16x1xf32>
    %cst_53 = arith.constant 3.200000e+01 : f32
    %123 = vector.broadcast %cst_53 : f32 to vector<16x1xf32>
    %124 = arith.divf %122, %123 : vector<16x1xf32>
    %125 = arith.mulf %119, %119 : vector<16x1xf32>
    %126 = arith.subf %124, %125 : vector<16x1xf32>
    %127 = vector.broadcast %119 : vector<16x1xf32> to vector<16x32xf32>
    %128 = arith.subf %113, %127 : vector<16x32xf32>
    %cst_54 = arith.constant 9.99999974E-6 : f32
    %129 = vector.broadcast %cst_54 : f32 to vector<16x1xf32>
    %130 = arith.addf %126, %129 : vector<16x1xf32>
    %131 = math.rsqrt %130 : vector<16x1xf32>
    %132 = vector.broadcast %131 : vector<16x1xf32> to vector<16x32xf32>
    %133 = arith.mulf %128, %132 : vector<16x32xf32>
    %134 = vector.broadcast %114 : vector<1x32xf32> to vector<16x32xf32>
    %135 = arith.mulf %133, %134 : vector<16x32xf32>
    %136 = vector.broadcast %115 : vector<1x32xf32> to vector<16x32xf32>
    %137 = arith.addf %135, %136 : vector<16x32xf32>
    %c1_55 = arith.constant 1 : index
    %c1_56 = arith.constant 1 : index
    %c0_57 = arith.constant 0 : index
    %c0_58 = arith.constant 0 : index
    %138 = vector.load %arg4[%c1_55, %c1_56, %c0_57, %c0_58] : memref<4x2x32x32xbf16, #tpu.memory_space<vmem>>, vector<1x1x32x32xbf16>
    %139 = vector.shape_cast %138 : vector<1x1x32x32xbf16> to vector<32x32xbf16>
    %140 = vector.extract_strided_slice %99 {offsets = [3, 0], sizes = [1, 32], strides = [1, 1]} : vector<4x32xf32> to vector<1x32xf32>
    %141 = arith.truncf %137 : vector<16x32xf32> to vector<16x32xbf16>
    %142 = vector.shape_cast %141 : vector<16x32xbf16> to vector<1x16x32xbf16>
    "tpu.trace_start"() <{level = 10 : i32, message = "bjk,bkc->bjc"}> : () -> ()
    %cst_59 = arith.constant dense<0.000000e+00> : vector<1x16x32xf32>
    %143 = tpu.matmul %0, %142, %cst_59 {dimension_numbers = #tpu.dot_dimension_numbers<[2], [1], [1], [2], [0, 0, 0, 1, 1, 2], [0], [0]>} : vector<1x16x16xbf16>, vector<1x16x32xbf16>, vector<1x16x32xf32> -> vector<1x16x32xf32>
    "tpu.trace_stop"() : () -> ()
    %144 = vector.shape_cast %143 : vector<1x16x32xf32> to vector<16x32xf32>
    %cst_60 = arith.constant 3.000000e-01 : f32
    %145 = vector.broadcast %cst_60 : f32 to vector<16x32xf32>
    %146 = arith.mulf %145, %97 : vector<16x32xf32>
    %147 = arith.addf %144, %146 : vector<16x32xf32>
    %148 = arith.truncf %147 : vector<16x32xf32> to vector<16x32xbf16>
    %cst_61 = arith.constant dense<0.000000e+00> : vector<16x32xf32>
    %149 = tpu.matmul %148, %139, %cst_61 {dimension_numbers = #tpu.dot_dimension_numbers<[1], [0], [0], [1], [0, 0, 1, 1], [], []>} : vector<16x32xbf16>, vector<32x32xbf16>, vector<16x32xf32> -> vector<16x32xf32>
    %150 = vector.broadcast %140 : vector<1x32xf32> to vector<16x32xf32>
    %151 = arith.addf %149, %150 : vector<16x32xf32>
    %cst_62 = arith.constant 5.000000e-01 : f32
    %152 = vector.broadcast %cst_62 : f32 to vector<16x32xf32>
    %153 = arith.mulf %152, %151 : vector<16x32xf32>
    %cst_63 = arith.constant 4.471500e-02 : f32
    %154 = vector.broadcast %cst_63 : f32 to vector<16x32xf32>
    %155 = arith.mulf %154, %151 : vector<16x32xf32>
    %156 = arith.mulf %155, %151 : vector<16x32xf32>
    %157 = arith.mulf %156, %151 : vector<16x32xf32>
    %158 = arith.addf %151, %157 : vector<16x32xf32>
    %cst_64 = arith.constant 0.797884583 : f32
    %159 = vector.broadcast %cst_64 : f32 to vector<16x32xf32>
    %160 = arith.mulf %159, %158 : vector<16x32xf32>
    %161 = math.tanh %160 : vector<16x32xf32>
    %cst_65 = arith.constant 1.000000e+00 : f32
    %162 = vector.broadcast %cst_65 : f32 to vector<16x32xf32>
    %163 = arith.addf %162, %161 : vector<16x32xf32>
    %164 = arith.mulf %153, %163 : vector<16x32xf32>
    %165 = arith.addf %97, %164 : vector<16x32xf32>
    %c2 = arith.constant 2 : index
    %c0_66 = arith.constant 0 : index
    %c0_67 = arith.constant 0 : index
    %166 = vector.load %arg5[%c2, %c0_66, %c0_67] : memref<4x4x32xf32, #tpu.memory_space<vmem>>, vector<1x4x32xf32>
    %167 = vector.shape_cast %166 : vector<1x4x32xf32> to vector<4x32xf32>
    %c2_68 = arith.constant 2 : index
    %c0_69 = arith.constant 0 : index
    %c0_70 = arith.constant 0 : index
    %c0_71 = arith.constant 0 : index
    %168 = vector.load %arg4[%c2_68, %c0_69, %c0_70, %c0_71] : memref<4x2x32x32xbf16, #tpu.memory_space<vmem>>, vector<1x1x32x32xbf16>
    %169 = vector.shape_cast %168 : vector<1x1x32x32xbf16> to vector<32x32xbf16>
    %170 = vector.extract_strided_slice %167 {offsets = [0, 0], sizes = [1, 32], strides = [1, 1]} : vector<4x32xf32> to vector<1x32xf32>
    %171 = arith.truncf %165 : vector<16x32xf32> to vector<16x32xbf16>
    %172 = vector.shape_cast %171 : vector<16x32xbf16> to vector<1x16x32xbf16>
    "tpu.trace_start"() <{level = 10 : i32, message = "bjk,bkc->bjc"}> : () -> ()
    %cst_72 = arith.constant dense<0.000000e+00> : vector<1x16x32xf32>
    %173 = tpu.matmul %0, %172, %cst_72 {dimension_numbers = #tpu.dot_dimension_numbers<[2], [1], [1], [2], [0, 0, 0, 1, 1, 2], [0], [0]>} : vector<1x16x16xbf16>, vector<1x16x32xbf16>, vector<1x16x32xf32> -> vector<1x16x32xf32>
    "tpu.trace_stop"() : () -> ()
    %174 = vector.shape_cast %173 : vector<1x16x32xf32> to vector<16x32xf32>
    %cst_73 = arith.constant 3.000000e-01 : f32
    %175 = vector.broadcast %cst_73 : f32 to vector<16x32xf32>
    %176 = arith.mulf %175, %165 : vector<16x32xf32>
    %177 = arith.addf %174, %176 : vector<16x32xf32>
    %178 = arith.truncf %177 : vector<16x32xf32> to vector<16x32xbf16>
    %cst_74 = arith.constant dense<0.000000e+00> : vector<16x32xf32>
    %179 = tpu.matmul %178, %169, %cst_74 {dimension_numbers = #tpu.dot_dimension_numbers<[1], [0], [0], [1], [0, 0, 1, 1], [], []>} : vector<16x32xbf16>, vector<32x32xbf16>, vector<16x32xf32> -> vector<16x32xf32>
    %180 = vector.broadcast %170 : vector<1x32xf32> to vector<16x32xf32>
    %181 = arith.addf %179, %180 : vector<16x32xf32>
    %182 = vector.extract_strided_slice %167 {offsets = [1, 0], sizes = [1, 32], strides = [1, 1]} : vector<4x32xf32> to vector<1x32xf32>
    %183 = vector.extract_strided_slice %167 {offsets = [2, 0], sizes = [1, 32], strides = [1, 1]} : vector<4x32xf32> to vector<1x32xf32>
    %cst_75 = arith.constant dense<0.000000e+00> : vector<16xf32>
    %184 = vector.multi_reduction <add>, %181, %cst_75 [1] : vector<16x32xf32> to vector<16xf32>
    %185 = vector.shape_cast %184 : vector<16xf32> to vector<16x1xf32>
    %cst_76 = arith.constant 3.200000e+01 : f32
    %186 = vector.broadcast %cst_76 : f32 to vector<16x1xf32>
    %187 = arith.divf %185, %186 : vector<16x1xf32>
    %188 = arith.mulf %181, %181 : vector<16x32xf32>
    %cst_77 = arith.constant dense<0.000000e+00> : vector<16xf32>
    %189 = vector.multi_reduction <add>, %188, %cst_77 [1] : vector<16x32xf32> to vector<16xf32>
    %190 = vector.shape_cast %189 : vector<16xf32> to vector<16x1xf32>
    %cst_78 = arith.constant 3.200000e+01 : f32
    %191 = vector.broadcast %cst_78 : f32 to vector<16x1xf32>
    %192 = arith.divf %190, %191 : vector<16x1xf32>
    %193 = arith.mulf %187, %187 : vector<16x1xf32>
    %194 = arith.subf %192, %193 : vector<16x1xf32>
    %195 = vector.broadcast %187 : vector<16x1xf32> to vector<16x32xf32>
    %196 = arith.subf %181, %195 : vector<16x32xf32>
    %cst_79 = arith.constant 9.99999974E-6 : f32
    %197 = vector.broadcast %cst_79 : f32 to vector<16x1xf32>
    %198 = arith.addf %194, %197 : vector<16x1xf32>
    %199 = math.rsqrt %198 : vector<16x1xf32>
    %200 = vector.broadcast %199 : vector<16x1xf32> to vector<16x32xf32>
    %201 = arith.mulf %196, %200 : vector<16x32xf32>
    %202 = vector.broadcast %182 : vector<1x32xf32> to vector<16x32xf32>
    %203 = arith.mulf %201, %202 : vector<16x32xf32>
    %204 = vector.broadcast %183 : vector<1x32xf32> to vector<16x32xf32>
    %205 = arith.addf %203, %204 : vector<16x32xf32>
    %c2_80 = arith.constant 2 : index
    %c1_81 = arith.constant 1 : index
    %c0_82 = arith.constant 0 : index
    %c0_83 = arith.constant 0 : index
    %206 = vector.load %arg4[%c2_80, %c1_81, %c0_82, %c0_83] : memref<4x2x32x32xbf16, #tpu.memory_space<vmem>>, vector<1x1x32x32xbf16>
    %207 = vector.shape_cast %206 : vector<1x1x32x32xbf16> to vector<32x32xbf16>
    %208 = vector.extract_strided_slice %167 {offsets = [3, 0], sizes = [1, 32], strides = [1, 1]} : vector<4x32xf32> to vector<1x32xf32>
    %209 = arith.truncf %205 : vector<16x32xf32> to vector<16x32xbf16>
    %210 = vector.shape_cast %209 : vector<16x32xbf16> to vector<1x16x32xbf16>
    "tpu.trace_start"() <{level = 10 : i32, message = "bjk,bkc->bjc"}> : () -> ()
    %cst_84 = arith.constant dense<0.000000e+00> : vector<1x16x32xf32>
    %211 = tpu.matmul %0, %210, %cst_84 {dimension_numbers = #tpu.dot_dimension_numbers<[2], [1], [1], [2], [0, 0, 0, 1, 1, 2], [0], [0]>} : vector<1x16x16xbf16>, vector<1x16x32xbf16>, vector<1x16x32xf32> -> vector<1x16x32xf32>
    "tpu.trace_stop"() : () -> ()
    %212 = vector.shape_cast %211 : vector<1x16x32xf32> to vector<16x32xf32>
    %cst_85 = arith.constant 3.000000e-01 : f32
    %213 = vector.broadcast %cst_85 : f32 to vector<16x32xf32>
    %214 = arith.mulf %213, %165 : vector<16x32xf32>
    %215 = arith.addf %212, %214 : vector<16x32xf32>
    %216 = arith.truncf %215 : vector<16x32xf32> to vector<16x32xbf16>
    %cst_86 = arith.constant dense<0.000000e+00> : vector<16x32xf32>
    %217 = tpu.matmul %216, %207, %cst_86 {dimension_numbers = #tpu.dot_dimension_numbers<[1], [0], [0], [1], [0, 0, 1, 1], [], []>} : vector<16x32xbf16>, vector<32x32xbf16>, vector<16x32xf32> -> vector<16x32xf32>
    %218 = vector.broadcast %208 : vector<1x32xf32> to vector<16x32xf32>
    %219 = arith.addf %217, %218 : vector<16x32xf32>
    %cst_87 = arith.constant 5.000000e-01 : f32
    %220 = vector.broadcast %cst_87 : f32 to vector<16x32xf32>
    %221 = arith.mulf %220, %219 : vector<16x32xf32>
    %cst_88 = arith.constant 4.471500e-02 : f32
    %222 = vector.broadcast %cst_88 : f32 to vector<16x32xf32>
    %223 = arith.mulf %222, %219 : vector<16x32xf32>
    %224 = arith.mulf %223, %219 : vector<16x32xf32>
    %225 = arith.mulf %224, %219 : vector<16x32xf32>
    %226 = arith.addf %219, %225 : vector<16x32xf32>
    %cst_89 = arith.constant 0.797884583 : f32
    %227 = vector.broadcast %cst_89 : f32 to vector<16x32xf32>
    %228 = arith.mulf %227, %226 : vector<16x32xf32>
    %229 = math.tanh %228 : vector<16x32xf32>
    %cst_90 = arith.constant 1.000000e+00 : f32
    %230 = vector.broadcast %cst_90 : f32 to vector<16x32xf32>
    %231 = arith.addf %230, %229 : vector<16x32xf32>
    %232 = arith.mulf %221, %231 : vector<16x32xf32>
    %233 = arith.addf %165, %232 : vector<16x32xf32>
    %c3 = arith.constant 3 : index
    %c0_91 = arith.constant 0 : index
    %c0_92 = arith.constant 0 : index
    %234 = vector.load %arg5[%c3, %c0_91, %c0_92] : memref<4x4x32xf32, #tpu.memory_space<vmem>>, vector<1x4x32xf32>
    %235 = vector.shape_cast %234 : vector<1x4x32xf32> to vector<4x32xf32>
    %c3_93 = arith.constant 3 : index
    %c0_94 = arith.constant 0 : index
    %c0_95 = arith.constant 0 : index
    %c0_96 = arith.constant 0 : index
    %236 = vector.load %arg4[%c3_93, %c0_94, %c0_95, %c0_96] : memref<4x2x32x32xbf16, #tpu.memory_space<vmem>>, vector<1x1x32x32xbf16>
    %237 = vector.shape_cast %236 : vector<1x1x32x32xbf16> to vector<32x32xbf16>
    %238 = vector.extract_strided_slice %235 {offsets = [0, 0], sizes = [1, 32], strides = [1, 1]} : vector<4x32xf32> to vector<1x32xf32>
    %239 = arith.truncf %233 : vector<16x32xf32> to vector<16x32xbf16>
    %240 = vector.shape_cast %239 : vector<16x32xbf16> to vector<1x16x32xbf16>
    "tpu.trace_start"() <{level = 10 : i32, message = "bjk,bkc->bjc"}> : () -> ()
    %cst_97 = arith.constant dense<0.000000e+00> : vector<1x16x32xf32>
    %241 = tpu.matmul %0, %240, %cst_97 {dimension_numbers = #tpu.dot_dimension_numbers<[2], [1], [1], [2], [0, 0, 0, 1, 1, 2], [0], [0]>} : vector<1x16x16xbf16>, vector<1x16x32xbf16>, vector<1x16x32xf32> -> vector<1x16x32xf32>
    "tpu.trace_stop"() : () -> ()
    %242 = vector.shape_cast %241 : vector<1x16x32xf32> to vector<16x32xf32>
    %cst_98 = arith.constant 3.000000e-01 : f32
    %243 = vector.broadcast %cst_98 : f32 to vector<16x32xf32>
    %244 = arith.mulf %243, %233 : vector<16x32xf32>
    %245 = arith.addf %242, %244 : vector<16x32xf32>
    %246 = arith.truncf %245 : vector<16x32xf32> to vector<16x32xbf16>
    %cst_99 = arith.constant dense<0.000000e+00> : vector<16x32xf32>
    %247 = tpu.matmul %246, %237, %cst_99 {dimension_numbers = #tpu.dot_dimension_numbers<[1], [0], [0], [1], [0, 0, 1, 1], [], []>} : vector<16x32xbf16>, vector<32x32xbf16>, vector<16x32xf32> -> vector<16x32xf32>
    %248 = vector.broadcast %238 : vector<1x32xf32> to vector<16x32xf32>
    %249 = arith.addf %247, %248 : vector<16x32xf32>
    %250 = vector.extract_strided_slice %235 {offsets = [1, 0], sizes = [1, 32], strides = [1, 1]} : vector<4x32xf32> to vector<1x32xf32>
    %251 = vector.extract_strided_slice %235 {offsets = [2, 0], sizes = [1, 32], strides = [1, 1]} : vector<4x32xf32> to vector<1x32xf32>
    %cst_100 = arith.constant dense<0.000000e+00> : vector<16xf32>
    %252 = vector.multi_reduction <add>, %249, %cst_100 [1] : vector<16x32xf32> to vector<16xf32>
    %253 = vector.shape_cast %252 : vector<16xf32> to vector<16x1xf32>
    %cst_101 = arith.constant 3.200000e+01 : f32
    %254 = vector.broadcast %cst_101 : f32 to vector<16x1xf32>
    %255 = arith.divf %253, %254 : vector<16x1xf32>
    %256 = arith.mulf %249, %249 : vector<16x32xf32>
    %cst_102 = arith.constant dense<0.000000e+00> : vector<16xf32>
    %257 = vector.multi_reduction <add>, %256, %cst_102 [1] : vector<16x32xf32> to vector<16xf32>
    %258 = vector.shape_cast %257 : vector<16xf32> to vector<16x1xf32>
    %cst_103 = arith.constant 3.200000e+01 : f32
    %259 = vector.broadcast %cst_103 : f32 to vector<16x1xf32>
    %260 = arith.divf %258, %259 : vector<16x1xf32>
    %261 = arith.mulf %255, %255 : vector<16x1xf32>
    %262 = arith.subf %260, %261 : vector<16x1xf32>
    %263 = vector.broadcast %255 : vector<16x1xf32> to vector<16x32xf32>
    %264 = arith.subf %249, %263 : vector<16x32xf32>
    %cst_104 = arith.constant 9.99999974E-6 : f32
    %265 = vector.broadcast %cst_104 : f32 to vector<16x1xf32>
    %266 = arith.addf %262, %265 : vector<16x1xf32>
    %267 = math.rsqrt %266 : vector<16x1xf32>
    %268 = vector.broadcast %267 : vector<16x1xf32> to vector<16x32xf32>
    %269 = arith.mulf %264, %268 : vector<16x32xf32>
    %270 = vector.broadcast %250 : vector<1x32xf32> to vector<16x32xf32>
    %271 = arith.mulf %269, %270 : vector<16x32xf32>
    %272 = vector.broadcast %251 : vector<1x32xf32> to vector<16x32xf32>
    %273 = arith.addf %271, %272 : vector<16x32xf32>
    %c3_105 = arith.constant 3 : index
    %c1_106 = arith.constant 1 : index
    %c0_107 = arith.constant 0 : index
    %c0_108 = arith.constant 0 : index
    %274 = vector.load %arg4[%c3_105, %c1_106, %c0_107, %c0_108] : memref<4x2x32x32xbf16, #tpu.memory_space<vmem>>, vector<1x1x32x32xbf16>
    %275 = vector.shape_cast %274 : vector<1x1x32x32xbf16> to vector<32x32xbf16>
    %276 = vector.extract_strided_slice %235 {offsets = [3, 0], sizes = [1, 32], strides = [1, 1]} : vector<4x32xf32> to vector<1x32xf32>
    %277 = arith.truncf %273 : vector<16x32xf32> to vector<16x32xbf16>
    %278 = vector.shape_cast %277 : vector<16x32xbf16> to vector<1x16x32xbf16>
    "tpu.trace_start"() <{level = 10 : i32, message = "bjk,bkc->bjc"}> : () -> ()
    %cst_109 = arith.constant dense<0.000000e+00> : vector<1x16x32xf32>
    %279 = tpu.matmul %0, %278, %cst_109 {dimension_numbers = #tpu.dot_dimension_numbers<[2], [1], [1], [2], [0, 0, 0, 1, 1, 2], [0], [0]>} : vector<1x16x16xbf16>, vector<1x16x32xbf16>, vector<1x16x32xf32> -> vector<1x16x32xf32>
    "tpu.trace_stop"() : () -> ()
    %280 = vector.shape_cast %279 : vector<1x16x32xf32> to vector<16x32xf32>
    %cst_110 = arith.constant 3.000000e-01 : f32
    %281 = vector.broadcast %cst_110 : f32 to vector<16x32xf32>
    %282 = arith.mulf %281, %233 : vector<16x32xf32>
    %283 = arith.addf %280, %282 : vector<16x32xf32>
    %284 = arith.truncf %283 : vector<16x32xf32> to vector<16x32xbf16>
    %cst_111 = arith.constant dense<0.000000e+00> : vector<16x32xf32>
    %285 = tpu.matmul %284, %275, %cst_111 {dimension_numbers = #tpu.dot_dimension_numbers<[1], [0], [0], [1], [0, 0, 1, 1], [], []>} : vector<16x32xbf16>, vector<32x32xbf16>, vector<16x32xf32> -> vector<16x32xf32>
    %286 = vector.broadcast %276 : vector<1x32xf32> to vector<16x32xf32>
    %287 = arith.addf %285, %286 : vector<16x32xf32>
    %cst_112 = arith.constant 5.000000e-01 : f32
    %288 = vector.broadcast %cst_112 : f32 to vector<16x32xf32>
    %289 = arith.mulf %288, %287 : vector<16x32xf32>
    %cst_113 = arith.constant 4.471500e-02 : f32
    %290 = vector.broadcast %cst_113 : f32 to vector<16x32xf32>
    %291 = arith.mulf %290, %287 : vector<16x32xf32>
    %292 = arith.mulf %291, %287 : vector<16x32xf32>
    %293 = arith.mulf %292, %287 : vector<16x32xf32>
    %294 = arith.addf %287, %293 : vector<16x32xf32>
    %cst_114 = arith.constant 0.797884583 : f32
    %295 = vector.broadcast %cst_114 : f32 to vector<16x32xf32>
    %296 = arith.mulf %295, %294 : vector<16x32xf32>
    %297 = math.tanh %296 : vector<16x32xf32>
    %cst_115 = arith.constant 1.000000e+00 : f32
    %298 = vector.broadcast %cst_115 : f32 to vector<16x32xf32>
    %299 = arith.addf %298, %297 : vector<16x32xf32>
    %300 = arith.mulf %289, %299 : vector<16x32xf32>
    %301 = arith.addf %233, %300 : vector<16x32xf32>
    %c0_116 = arith.constant 0 : index
    %c0_117 = arith.constant 0 : index
    %302 = vector.load %arg7[%c0_116, %c0_117] : memref<3x16xf32, #tpu.memory_space<vmem>>, vector<3x16xf32>
    %303 = arith.truncf %301 : vector<16x32xf32> to vector<16x32xbf16>
    %c0_118 = arith.constant 0 : index
    %c0_119 = arith.constant 0 : index
    %c0_120 = arith.constant 0 : index
    %304 = vector.load %arg6[%c0_118, %c0_119, %c0_120] : memref<3x32x16xbf16, #tpu.memory_space<vmem>>, vector<1x32x16xbf16>
    %305 = vector.shape_cast %304 : vector<1x32x16xbf16> to vector<32x16xbf16>
    %cst_121 = arith.constant dense<0.000000e+00> : vector<16x16xf32>
    %306 = tpu.matmul %303, %305, %cst_121 {dimension_numbers = #tpu.dot_dimension_numbers<[1], [0], [0], [1], [0, 0, 1, 1], [], []>} : vector<16x32xbf16>, vector<32x16xbf16>, vector<16x16xf32> -> vector<16x16xf32>
    %307 = vector.extract_strided_slice %302 {offsets = [0, 0], sizes = [1, 16], strides = [1, 1]} : vector<3x16xf32> to vector<1x16xf32>
    %308 = vector.broadcast %307 : vector<1x16xf32> to vector<16x16xf32>
    %309 = arith.addf %306, %308 : vector<16x16xf32>
    %c1_122 = arith.constant 1 : index
    %c0_123 = arith.constant 0 : index
    %c0_124 = arith.constant 0 : index
    %310 = vector.load %arg6[%c1_122, %c0_123, %c0_124] : memref<3x32x16xbf16, #tpu.memory_space<vmem>>, vector<1x32x16xbf16>
    %311 = vector.shape_cast %310 : vector<1x32x16xbf16> to vector<32x16xbf16>
    %cst_125 = arith.constant dense<0.000000e+00> : vector<16x16xf32>
    %312 = tpu.matmul %303, %311, %cst_125 {dimension_numbers = #tpu.dot_dimension_numbers<[1], [0], [0], [1], [0, 0, 1, 1], [], []>} : vector<16x32xbf16>, vector<32x16xbf16>, vector<16x16xf32> -> vector<16x16xf32>
    %313 = vector.extract_strided_slice %302 {offsets = [1, 0], sizes = [1, 16], strides = [1, 1]} : vector<3x16xf32> to vector<1x16xf32>
    %314 = vector.broadcast %313 : vector<1x16xf32> to vector<16x16xf32>
    %315 = arith.addf %312, %314 : vector<16x16xf32>
    %c2_126 = arith.constant 2 : index
    %c0_127 = arith.constant 0 : index
    %c0_128 = arith.constant 0 : index
    %316 = vector.load %arg6[%c2_126, %c0_127, %c0_128] : memref<3x32x16xbf16, #tpu.memory_space<vmem>>, vector<1x32x16xbf16>
    %317 = vector.shape_cast %316 : vector<1x32x16xbf16> to vector<32x16xbf16>
    %cst_129 = arith.constant dense<0.000000e+00> : vector<16x16xf32>
    %318 = tpu.matmul %303, %317, %cst_129 {dimension_numbers = #tpu.dot_dimension_numbers<[1], [0], [0], [1], [0, 0, 1, 1], [], []>} : vector<16x32xbf16>, vector<32x16xbf16>, vector<16x16xf32> -> vector<16x16xf32>
    %319 = vector.extract_strided_slice %302 {offsets = [2, 0], sizes = [1, 16], strides = [1, 1]} : vector<3x16xf32> to vector<1x16xf32>
    %320 = vector.broadcast %319 : vector<1x16xf32> to vector<16x16xf32>
    %321 = arith.addf %318, %320 : vector<16x16xf32>
    %322 = arith.truncf %309 : vector<16x16xf32> to vector<16x16xbf16>
    %323 = vector.shape_cast %322 : vector<16x16xbf16> to vector<1x16x16xbf16>
    %324 = arith.truncf %315 : vector<16x16xf32> to vector<16x16xbf16>
    %325 = vector.shape_cast %324 : vector<16x16xbf16> to vector<1x16x16xbf16>
    %326 = arith.truncf %321 : vector<16x16xf32> to vector<16x16xbf16>
    %327 = vector.shape_cast %326 : vector<16x16xbf16> to vector<1x16x16xbf16>
    "tpu.trace_start"() <{level = 10 : i32, message = "bjd,bkd->bjk"}> : () -> ()
    %cst_130 = arith.constant dense<0.000000e+00> : vector<1x16x16xf32>
    %328 = tpu.matmul %325, %327, %cst_130 {dimension_numbers = #tpu.dot_dimension_numbers<[2], [2], [1], [1], [0, 0, 0, 1, 1, 1], [0], [0]>} : vector<1x16x16xbf16>, vector<1x16x16xbf16>, vector<1x16x16xf32> -> vector<1x16x16xf32>
    "tpu.trace_stop"() : () -> ()
    %cst_131 = arith.constant dense<0xFF800000> : vector<1x16xf32>
    %329 = vector.multi_reduction <maximumf>, %328, %cst_131 [2] : vector<1x16x16xf32> to vector<1x16xf32>
    %330 = vector.shape_cast %329 : vector<1x16xf32> to vector<1x16x1xf32>
    %331 = vector.broadcast %330 : vector<1x16x1xf32> to vector<1x16x16xf32>
    %332 = arith.subf %328, %331 : vector<1x16x16xf32>
    %333 = math.exp %332 : vector<1x16x16xf32>
    %cst_132 = arith.constant dense<0.000000e+00> : vector<1x16xf32>
    %334 = vector.multi_reduction <add>, %333, %cst_132 [2] : vector<1x16x16xf32> to vector<1x16xf32>
    %335 = vector.shape_cast %334 : vector<1x16xf32> to vector<1x16x1xf32>
    %336 = tpu.reciprocal %335 {approx = true} : vector<1x16x1xf32> -> vector<1x16x1xf32>
    %337 = vector.broadcast %336 : vector<1x16x1xf32> to vector<1x16x16xf32>
    %338 = arith.mulf %333, %337 : vector<1x16x16xf32>
    %339 = arith.truncf %338 : vector<1x16x16xf32> to vector<1x16x16xbf16>
    "tpu.trace_start"() <{level = 10 : i32, message = "bjk,bkd->bjd"}> : () -> ()
    %cst_133 = arith.constant dense<0.000000e+00> : vector<1x16x16xf32>
    %340 = tpu.matmul %339, %323, %cst_133 {dimension_numbers = #tpu.dot_dimension_numbers<[2], [1], [1], [2], [0, 0, 0, 1, 1, 2], [0], [0]>} : vector<1x16x16xbf16>, vector<1x16x16xbf16>, vector<1x16x16xf32> -> vector<1x16x16xf32>
    "tpu.trace_stop"() : () -> ()
    %341 = vector.shape_cast %340 : vector<1x16x16xf32> to vector<16x16xf32>
    %342 = arith.truncf %341 : vector<16x16xf32> to vector<16x16xbf16>
    %c0_134 = arith.constant 0 : index
    %c0_135 = arith.constant 0 : index
    %343 = vector.load %arg8[%c0_134, %c0_135] : memref<16x32xbf16, #tpu.memory_space<vmem>>, vector<16x32xbf16>
    %cst_136 = arith.constant dense<0.000000e+00> : vector<16x32xf32>
    %344 = tpu.matmul %342, %343, %cst_136 {dimension_numbers = #tpu.dot_dimension_numbers<[1], [0], [0], [1], [0, 0, 1, 1], [], []>} : vector<16x16xbf16>, vector<16x32xbf16>, vector<16x32xf32> -> vector<16x32xf32>
    %345 = vector.extract_strided_slice %1 {offsets = [1, 0], sizes = [1, 32], strides = [1, 1]} : vector<3x32xf32> to vector<1x32xf32>
    %346 = vector.broadcast %345 : vector<1x32xf32> to vector<16x32xf32>
    %347 = arith.mulf %344, %346 : vector<16x32xf32>
    %348 = vector.extract_strided_slice %1 {offsets = [2, 0], sizes = [1, 32], strides = [1, 1]} : vector<3x32xf32> to vector<1x32xf32>
    %349 = vector.broadcast %348 : vector<1x32xf32> to vector<16x32xf32>
    %350 = arith.addf %347, %349 : vector<16x32xf32>
    %351 = arith.addf %350, %301 : vector<16x32xf32>
    %c0_137 = arith.constant 0 : index
    %c0_138 = arith.constant 0 : index
    %352 = vector.load %arg10[%c0_137, %c0_138] : memref<32x128xbf16, #tpu.memory_space<vmem>>, vector<32x128xbf16>
    %c0_139 = arith.constant 0 : index
    %c0_140 = arith.constant 0 : index
    %353 = vector.load %arg11[%c0_139, %c0_140] : memref<1x128xf32, #tpu.memory_space<vmem>>, vector<1x128xf32>
    %354 = arith.truncf %351 : vector<16x32xf32> to vector<16x32xbf16>
    %355 = vector.shape_cast %354 : vector<16x32xbf16> to vector<1x16x32xbf16>
    "tpu.trace_start"() <{level = 10 : i32, message = "bjk,bkc->bjc"}> : () -> ()
    %cst_141 = arith.constant dense<0.000000e+00> : vector<1x16x32xf32>
    %356 = tpu.matmul %0, %355, %cst_141 {dimension_numbers = #tpu.dot_dimension_numbers<[2], [1], [1], [2], [0, 0, 0, 1, 1, 2], [0], [0]>} : vector<1x16x16xbf16>, vector<1x16x32xbf16>, vector<1x16x32xf32> -> vector<1x16x32xf32>
    "tpu.trace_stop"() : () -> ()
    %357 = vector.shape_cast %356 : vector<1x16x32xf32> to vector<16x32xf32>
    %cst_142 = arith.constant 3.000000e-01 : f32
    %358 = vector.broadcast %cst_142 : f32 to vector<16x32xf32>
    %359 = arith.mulf %358, %29 : vector<16x32xf32>
    %360 = arith.addf %357, %359 : vector<16x32xf32>
    %361 = arith.truncf %360 : vector<16x32xf32> to vector<16x32xbf16>
    %cst_143 = arith.constant dense<0.000000e+00> : vector<16x128xf32>
    %362 = tpu.matmul %361, %352, %cst_143 {dimension_numbers = #tpu.dot_dimension_numbers<[1], [0], [0], [1], [0, 0, 1, 1], [], []>} : vector<16x32xbf16>, vector<32x128xbf16>, vector<16x128xf32> -> vector<16x128xf32>
    %363 = vector.broadcast %353 : vector<1x128xf32> to vector<16x128xf32>
    %364 = arith.addf %362, %363 : vector<16x128xf32>
    %365 = vector.shape_cast %364 : vector<16x128xf32> to vector<1x16x128xf32>
    %c0_144 = arith.constant 0 : index
    %c0_145 = arith.constant 0 : index
    %c0_146 = arith.constant 0 : index
    %366 = vector.load %arg12[%c0_144, %c0_145, %c0_146] : memref<1x16x128xf32, #tpu.memory_space<vmem>>, vector<1x16x128xf32>
    tpu.vector_store %arg12[%c0_144, %c0_145, %c0_146], %365 {strides = array<i32>} : memref<1x16x128xf32, #tpu.memory_space<vmem>>, vector<1x16x128xf32>,
    return
  }
  func.func @transform_0(%arg0: i32) -> (i32, i32, i32) {
    %c0_i32 = arith.constant 0 : i32
    %c0_i32_0 = arith.constant 0 : i32
    %c0_i32_1 = arith.constant 0 : i32
    return %arg0, %c0_i32, %c0_i32_0 : i32, i32, i32
  }
  func.func @transform_1(%arg0: i32) -> (i32, i32, i32) {
    %c0_i32 = arith.constant 0 : i32
    %c0_i32_0 = arith.constant 0 : i32
    %c0_i32_1 = arith.constant 0 : i32
    %c0_i32_2 = arith.constant 0 : i32
    return %c0_i32, %c0_i32_0, %c0_i32_1 : i32, i32, i32
  }
  func.func @transform_2(%arg0: i32) -> (i32, i32) {
    %c0_i32 = arith.constant 0 : i32
    %c0_i32_0 = arith.constant 0 : i32
    %c0_i32_1 = arith.constant 0 : i32
    return %c0_i32, %c0_i32_0 : i32, i32
  }
  func.func @transform_3(%arg0: i32) -> (i32, i32, i32, i32) {
    %c0_i32 = arith.constant 0 : i32
    %c0_i32_0 = arith.constant 0 : i32
    %c0_i32_1 = arith.constant 0 : i32
    %c0_i32_2 = arith.constant 0 : i32
    %c0_i32_3 = arith.constant 0 : i32
    return %c0_i32, %c0_i32_0, %c0_i32_1, %c0_i32_2 : i32, i32, i32, i32
  }
  func.func @transform_4(%arg0: i32) -> (i32, i32, i32) {
    %c0_i32 = arith.constant 0 : i32
    %c0_i32_0 = arith.constant 0 : i32
    %c0_i32_1 = arith.constant 0 : i32
    %c0_i32_2 = arith.constant 0 : i32
    return %c0_i32, %c0_i32_0, %c0_i32_1 : i32, i32, i32
  }
  func.func @transform_5(%arg0: i32) -> (i32, i32, i32) {
    %c0_i32 = arith.constant 0 : i32
    %c0_i32_0 = arith.constant 0 : i32
    %c0_i32_1 = arith.constant 0 : i32
    %c0_i32_2 = arith.constant 0 : i32
    return %c0_i32, %c0_i32_0, %c0_i32_1 : i32, i32, i32
  }
  func.func @transform_6(%arg0: i32) -> (i32, i32) {
    %c0_i32 = arith.constant 0 : i32
    %c0_i32_0 = arith.constant 0 : i32
    %c0_i32_1 = arith.constant 0 : i32
    return %c0_i32, %c0_i32_0 : i32, i32
  }
  func.func @transform_7(%arg0: i32) -> (i32, i32) {
    %c0_i32 = arith.constant 0 : i32
    %c0_i32_0 = arith.constant 0 : i32
    %c0_i32_1 = arith.constant 0 : i32
    return %c0_i32, %c0_i32_0 : i32, i32
  }
  func.func @transform_8(%arg0: i32) -> (i32, i32) {
    %c0_i32 = arith.constant 0 : i32
    %c0_i32_0 = arith.constant 0 : i32
    %c0_i32_1 = arith.constant 0 : i32
    return %c0_i32, %c0_i32_0 : i32, i32
  }
  func.func @transform_9(%arg0: i32) -> (i32, i32) {
    %c0_i32 = arith.constant 0 : i32
    %c0_i32_0 = arith.constant 0 : i32
    %c0_i32_1 = arith.constant 0 : i32
    return %c0_i32, %c0_i32_0 : i32, i32
  }
  func.func @transform_10(%arg0: i32) -> (i32, i32) {
    %c0_i32 = arith.constant 0 : i32
    %c0_i32_0 = arith.constant 0 : i32
    %c0_i32_1 = arith.constant 0 : i32
    return %c0_i32, %c0_i32_0 : i32, i32
  }
  func.func @transform_11(%arg0: i32) -> (i32, i32, i32) {
    %c0_i32 = arith.constant 0 : i32
    %c0_i32_0 = arith.constant 0 : i32
    %c0_i32_1 = arith.constant 0 : i32
    return %arg0, %c0_i32, %c0_i32_0 : i32, i32, i32
  }
}

</mosaic_0001>

<llo_original>
// kernel: gsnet_gcn_forward.1
$region0: #{gsnet_gcn_forward.1}
  #allocation0 [shape = 'u32[]', space=smem, size = 0x4, offset = 0x4, fixed_abs, tag = 'smem constant byte address 0x4 - core index']
  #allocation1 [shape = 'u32[144,128]{1,0:T(1,128)}', space=vmem, size = 0x12000, scoped, tag = 'internal scratch']
  %s0 = inlined_call_operand.vmem [shape: f32[2,16,2], index: 0, kind: input, shape index: {}]
  %s1 = inlined_call_operand.vmem [shape: bf16[1,16,16], index: 1, kind: input, shape index: {}]
  %s2 = inlined_call_operand.vmem [shape: bf16[2,32], index: 2, kind: input, shape index: {}]
  %s3 = inlined_call_operand.vmem [shape: bf16[4,2,32,32], index: 3, kind: input, shape index: {}]
  %s4 = inlined_call_operand.vmem [shape: f32[4,4,32], index: 4, kind: input, shape index: {}]
  %s5 = inlined_call_operand.vmem [shape: bf16[3,32,16], index: 5, kind: input, shape index: {}]
  %s6 = inlined_call_operand.vmem [shape: f32[3,16], index: 6, kind: input, shape index: {}]
  %s7 = inlined_call_operand.vmem [shape: bf16[16,32], index: 7, kind: input, shape index: {}]
  %s8 = inlined_call_operand.vmem [shape: f32[3,32], index: 8, kind: input, shape index: {}]
  %s9 = inlined_call_operand.vmem [shape: bf16[32,128], index: 9, kind: input, shape index: {}]
  %s10 = inlined_call_operand.vmem [shape: f32[1,128], index: 10, kind: input, shape index: {}]
  %s11 = inlined_call_operand.vmem [shape: f32[2,16,128], index: 11, kind: output, shape index: {}]
  %s12 = sld [smem:[#allocation0]]
  $region77: #{gsnet_gcn_forward.1} parent=0
    _
  %s14 = ssub.s32 1, %s12
  %s15 = scalar_select 0, %s14, %s12
  loop: start=0, step=1, limit=4
  $region2: #{gsnet_gcn_forward.1} parent=0 // loop_pre_header
    _
  $region3: #{gsnet_gcn_forward.1} parent=0 // loop_header
    %s17 = sphi 0, %s21
    %p18 = scmp.ge.s32.totalorder %s17, 4
    %s27 = sphi 0, %s29
    %s30 = sphi 0, %s27
    %s31 = sphi 0, %s30
    %s47 = sphi 0, %s31
    %s51 = sphi 0, %s51
    %s53 = sphi 0, %s51
    %s54 = sphi 0, %s53
    %s68 = sphi 0, %s54
    %s72 = sphi 0, %s72
    %s74 = sphi 0, %s72
    %s75 = sphi 0, %s74
    %s89 = sphi 0, %s75
    %s93 = sphi 0, %s93
    %s95 = sphi 0, %s93
    %s96 = sphi 0, %s95
    %s110 = sphi 0, %s96
    %s114 = sphi 0, %s114
    %s116 = sphi 0, %s114
    %s117 = sphi 0, %s116
    %s131 = sphi 0, %s117
    %s135 = sphi 0, %s135
    %s137 = sphi 0, %s135
    %s138 = sphi 0, %s137
    %s152 = sphi 0, %s138
    %s156 = sphi 0, %s156
    %s158 = sphi 0, %s156
    %s159 = sphi 0, %s158
    %s173 = sphi 0, %s159
    %s177 = sphi 0, %s177
    %s179 = sphi 0, %s177
    %s180 = sphi 0, %s179
    %s194 = sphi 0, %s180
    %s198 = sphi 0, %s198
    %s200 = sphi 0, %s198
    %s201 = sphi 0, %s200
    %s215 = sphi 0, %s201
    %s219 = sphi 0, %s219
    %s221 = sphi 0, %s219
    %s222 = sphi 0, %s221
    %s236 = sphi 0, %s222
    %s240 = sphi 0, %s240
    %s242 = sphi 0, %s240
    %s243 = sphi 0, %s242
    %s257 = sphi 0, %s243
    %s263 = sphi 0, %s265
    %s266 = sphi 0, %s263
    %s267 = sphi 0, %s266
    %s283 = sphi 0, %s267
  $region4: #{gsnet_gcn_forward.1} parent=0 // loop_header_branch
    %20 = sbr.rel (%p18) target = $region8
  $region5: #{gsnet_gcn_forward.1} parent=0 // loop_body
    %s22 = ssub.s32 %s17, 1
    %s23 = ssub.s32 %s17, 2
    %s24 = sadd.s32 %s17, 1
    %s25 = ssub.s32 %s17, %s24
    %p26 = scmp.eq.s32.totalorder %s25, 0
    %s28 = sadd.s32 %s27, 1
    %s29 = scalar_select %p26, %s27, %s28
    %p32 = pneg %p26
    %p33 = scmp.eq.s32.totalorder %s17, 1
    %p34 = por %p32, %p33
    %p35 = scmp.ne.s32.totalorder %s27, %s30
    %p36 = scmp.eq.s32.totalorder %s17, 0
    %p37 = por %p35, %p36
    %p38 = scmp.ne.s32.totalorder %s27, %s30
    %p39 = scmp.eq.s32.totalorder %s22, 1
    %p40 = por %p38, %p39
    %p41 = scmp.ne.s32.totalorder %s30, %s31
    %p42 = scmp.eq.s32.totalorder %s22, 0
    %p43 = por %p41, %p42
    %p44 = scmp.ne.s32.totalorder %s30, %s31
    %p45 = scmp.eq.s32.totalorder %s23, 1
    %p46 = por %p44, %p45
    %p48 = scmp.ne.s32.totalorder %s31, %s47
    %p49 = scmp.eq.s32.totalorder %s23, 0
    %p50 = por %p48, %p49
    %s52 = sadd.s32 %s51, 1
    %p55 = scmp.eq.s32.totalorder %s17, 1
    %p56 = scmp.ne.s32.totalorder %s51, %s53
    %p57 = scmp.eq.s32.totalorder %s17, 0
    %p58 = por %p56, %p57
    %p59 = scmp.ne.s32.totalorder %s51, %s53
    %p60 = scmp.eq.s32.totalorder %s22, 1
    %p61 = por %p59, %p60
    %p62 = scmp.ne.s32.totalorder %s53, %s54
    %p63 = scmp.eq.s32.totalorder %s22, 0
    %p64 = por %p62, %p63
    %p65 = scmp.ne.s32.totalorder %s53, %s54
    %p66 = scmp.eq.s32.totalorder %s23, 1
    %p67 = por %p65, %p66
    %p69 = scmp.ne.s32.totalorder %s54, %s68
    %p70 = scmp.eq.s32.totalorder %s23, 0
    %p71 = por %p69, %p70
    %s73 = sadd.s32 %s72, 1
    %p76 = scmp.eq.s32.totalorder %s17, 1
    %p77 = scmp.ne.s32.totalorder %s72, %s74
    %p78 = scmp.eq.s32.totalorder %s17, 0
    %p79 = por %p77, %p78
    %p80 = scmp.ne.s32.totalorder %s72, %s74
    %p81 = scmp.eq.s32.totalorder %s22, 1
    %p82 = por %p80, %p81
    %p83 = scmp.ne.s32.totalorder %s74, %s75
    %p84 = scmp.eq.s32.totalorder %s22, 0
    %p85 = por %p83, %p84
    %p86 = scmp.ne.s32.totalorder %s74, %s75
    %p87 = scmp.eq.s32.totalorder %s23, 1
    %p88 = por %p86, %p87
    %p90 = scmp.ne.s32.totalorder %s75, %s89
    %p91 = scmp.eq.s32.totalorder %s23, 0
    %p92 = por %p90, %p91
    %s94 = sadd.s32 %s93, 1
    %p97 = scmp.eq.s32.totalorder %s17, 1
    %p98 = scmp.ne.s32.totalorder %s93, %s95
    %p99 = scmp.eq.s32.totalorder %s17, 0
    %p100 = por %p98, %p99
    %p101 = scmp.ne.s32.totalorder %s93, %s95
    %p102 = scmp.eq.s32.totalorder %s22, 1
    %p103 = por %p101, %p102
    %p104 = scmp.ne.s32.totalorder %s95, %s96
    %p105 = scmp.eq.s32.totalorder %s22, 0
    %p106 = por %p104, %p105
    %p107 = scmp.ne.s32.totalorder %s95, %s96
    %p108 = scmp.eq.s32.totalorder %s23, 1
    %p109 = por %p107, %p108
    %p111 = scmp.ne.s32.totalorder %s96, %s110
    %p112 = scmp.eq.s32.totalorder %s23, 0
    %p113 = por %p111, %p112
    %s115 = sadd.s32 %s114, 1
    %p118 = scmp.eq.s32.totalorder %s17, 1
    %p119 = scmp.ne.s32.totalorder %s114, %s116
    %p120 = scmp.eq.s32.totalorder %s17, 0
    %p121 = por %p119, %p120
    %p122 = scmp.ne.s32.totalorder %s114, %s116
    %p123 = scmp.eq.s32.totalorder %s22, 1
    %p124 = por %p122, %p123
    %p125 = scmp.ne.s32.totalorder %s116, %s117
    %p126 = scmp.eq.s32.totalorder %s22, 0
    %p127 = por %p125, %p126
    %p128 = scmp.ne.s32.totalorder %s116, %s117
    %p129 = scmp.eq.s32.totalorder %s23, 1
    %p130 = por %p128, %p129
    %p132 = scmp.ne.s32.totalorder %s117, %s131
    %p133 = scmp.eq.s32.totalorder %s23, 0
    %p134 = por %p132, %p133
    %s136 = sadd.s32 %s135, 1
    %p139 = scmp.eq.s32.totalorder %s17, 1
    %p140 = scmp.ne.s32.totalorder %s135, %s137
    %p141 = scmp.eq.s32.totalorder %s17, 0
    %p142 = por %p140, %p141
    %p143 = scmp.ne.s32.totalorder %s135, %s137
    %p144 = scmp.eq.s32.totalorder %s22, 1
    %p145 = por %p143, %p144
    %p146 = scmp.ne.s32.totalorder %s137, %s138
    %p147 = scmp.eq.s32.totalorder %s22, 0
    %p148 = por %p146, %p147
    %p149 = scmp.ne.s32.totalorder %s137, %s138
    %p150 = scmp.eq.s32.totalorder %s23, 1
    %p151 = por %p149, %p150
    %p153 = scmp.ne.s32.totalorder %s138, %s152
    %p154 = scmp.eq.s32.totalorder %s23, 0
    %p155 = por %p153, %p154
    %s157 = sadd.s32 %s156, 1
    %p160 = scmp.eq.s32.totalorder %s17, 1
    %p161 = scmp.ne.s32.totalorder %s156, %s158
    %p162 = scmp.eq.s32.totalorder %s17, 0
    %p163 = por %p161, %p162
    %p164 = scmp.ne.s32.totalorder %s156, %s158
    %p165 = scmp.eq.s32.totalorder %s22, 1
    %p166 = por %p164, %p165
    %p167 = scmp.ne.s32.totalorder %s158, %s159
    %p168 = scmp.eq.s32.totalorder %s22, 0
    %p169 = por %p167, %p168
    %p170 = scmp.ne.s32.totalorder %s158, %s159
    %p171 = scmp.eq.s32.totalorder %s23, 1
    %p172 = por %p170, %p171
    %p174 = scmp.ne.s32.totalorder %s159, %s173
    %p175 = scmp.eq.s32.totalorder %s23, 0
    %p176 = por %p174, %p175
    %s178 = sadd.s32 %s177, 1
    %p181 = scmp.eq.s32.totalorder %s17, 1
    %p182 = scmp.ne.s32.totalorder %s177, %s179
    %p183 = scmp.eq.s32.totalorder %s17, 0
    %p184 = por %p182, %p183
    %p185 = scmp.ne.s32.totalorder %s177, %s179
    %p186 = scmp.eq.s32.totalorder %s22, 1
    %p187 = por %p185, %p186
    %p188 = scmp.ne.s32.totalorder %s179, %s180
    %p189 = scmp.eq.s32.totalorder %s22, 0
    %p190 = por %p188, %p189
    %p191 = scmp.ne.s32.totalorder %s179, %s180
    %p192 = scmp.eq.s32.totalorder %s23, 1
    %p193 = por %p191, %p192
    %p195 = scmp.ne.s32.totalorder %s180, %s194
    %p196 = scmp.eq.s32.totalorder %s23, 0
    %p197 = por %p195, %p196
    %s199 = sadd.s32 %s198, 1
    %p202 = scmp.eq.s32.totalorder %s17, 1
    %p203 = scmp.ne.s32.totalorder %s198, %s200
    %p204 = scmp.eq.s32.totalorder %s17, 0
    %p205 = por %p203, %p204
    %p206 = scmp.ne.s32.totalorder %s198, %s200
    %p207 = scmp.eq.s32.totalorder %s22, 1
    %p208 = por %p206, %p207
    %p209 = scmp.ne.s32.totalorder %s200, %s201
    %p210 = scmp.eq.s32.totalorder %s22, 0
    %p211 = por %p209, %p210
    %p212 = scmp.ne.s32.totalorder %s200, %s201
    %p213 = scmp.eq.s32.totalorder %s23, 1
    %p214 = por %p212, %p213
    %p216 = scmp.ne.s32.totalorder %s201, %s215
    %p217 = scmp.eq.s32.totalorder %s23, 0
    %p218 = por %p216, %p217
    %s220 = sadd.s32 %s219, 1
    %p223 = scmp.eq.s32.totalorder %s17, 1
    %p224 = scmp.ne.s32.totalorder %s219, %s221
    %p225 = scmp.eq.s32.totalorder %s17, 0
    %p226 = por %p224, %p225
    %p227 = scmp.ne.s32.totalorder %s219, %s221
    %p228 = scmp.eq.s32.totalorder %s22, 1
    %p229 = por %p227, %p228
    %p230 = scmp.ne.s32.totalorder %s221, %s222
    %p231 = scmp.eq.s32.totalorder %s22, 0
    %p232 = por %p230, %p231
    %p233 = scmp.ne.s32.totalorder %s221, %s222
    %p234 = scmp.eq.s32.totalorder %s23, 1
    %p235 = por %p233, %p234
    %p237 = scmp.ne.s32.totalorder %s222, %s236
    %p238 = scmp.eq.s32.totalorder %s23, 0
    %p239 = por %p237, %p238
    %s241 = sadd.s32 %s240, 1
    %p244 = scmp.eq.s32.totalorder %s17, 1
    %p245 = scmp.ne.s32.totalorder %s240, %s242
    %p246 = scmp.eq.s32.totalorder %s17, 0
    %p247 = por %p245, %p246
    %p248 = scmp.ne.s32.totalorder %s240, %s242
    %p249 = scmp.eq.s32.totalorder %s22, 1
    %p250 = por %p248, %p249
    %p251 = scmp.ne.s32.totalorder %s242, %s243
    %p252 = scmp.eq.s32.totalorder %s22, 0
    %p253 = por %p251, %p252
    %p254 = scmp.ne.s32.totalorder %s242, %s243
    %p255 = scmp.eq.s32.totalorder %s23, 1
    %p256 = por %p254, %p255
    %p258 = scmp.ne.s32.totalorder %s243, %s257
    %p259 = scmp.eq.s32.totalorder %s23, 0
    %p260 = por %p258, %p259
    %s261 = ssub.s32 %s17, %s24
    %p262 = scmp.eq.s32.totalorder %s261, 0
    %s264 = sadd.s32 %s263, 1
    %s265 = scalar_select %p262, %s263, %s264
    %p268 = pneg %p262
    %p269 = scmp.eq.s32.totalorder %s17, 1
    %p270 = por %p268, %p269
    %p271 = scmp.ne.s32.totalorder %s263, %s266
    %p272 = scmp.eq.s32.totalorder %s17, 0
    %p273 = por %p271, %p272
    %p274 = scmp.ne.s32.totalorder %s263, %s266
    %p275 = scmp.eq.s32.totalorder %s22, 1
    %p276 = por %p274, %p275
    %p277 = scmp.ne.s32.totalorder %s266, %s267
    %p278 = scmp.eq.s32.totalorder %s22, 0
    %p279 = por %p277, %p278
    %p280 = scmp.ne.s32.totalorder %s266, %s267
    %p281 = scmp.eq.s32.totalorder %s23, 1
    %p282 = por %p280, %p281
    %p284 = scmp.ne.s32.totalorder %s267, %s283
    %p285 = scmp.eq.s32.totalorder %s23, 0
    %p286 = por %p284, %p285
    %p287 = scmp.le.s32.totalorder 1, %s17
    %p288 = scmp.lt.s32.totalorder %s17, 3
    %p289 = pnand %p287, %p288
    %p290 = pneg %p289
    // Predicated region
    $region9: #{gsnet_gcn_forward.1} parent=5 // pred_check
      _
    $region10: #{gsnet_gcn_forward.1} parent=5 // pred_check_branch
      %292 = sbr.rel (%p289) target = $region12
    $region11: #{gsnet_gcn_forward.1} parent=5 // pred_region
      %s293 = ssub.s32 %s17, 1
      // Predicated region
      $region13: #{gsnet_gcn_forward.1} parent=11 // pred_check
        %p294 = pneg %p64
      $region14: #{gsnet_gcn_forward.1} parent=11 // pred_check_branch
        %296 = sbr.rel (%p294) target = $region16
      $region15: #{gsnet_gcn_forward.1} parent=11 // pred_region
        _
      $region16: #{gsnet_gcn_forward.1} parent=11 // pred_fallthru
        _
      // Predicated region
      $region17: #{gsnet_gcn_forward.1} parent=11 // pred_check
        %p297 = pneg %p85
      $region18: #{gsnet_gcn_forward.1} parent=11 // pred_check_branch
        %299 = sbr.rel (%p297) target = $region20
      $region19: #{gsnet_gcn_forward.1} parent=11 // pred_region
        _
      $region20: #{gsnet_gcn_forward.1} parent=11 // pred_fallthru
        _
      // Predicated region
      $region21: #{gsnet_gcn_forward.1} parent=11 // pred_check
        %p300 = pneg %p106
      $region22: #{gsnet_gcn_forward.1} parent=11 // pred_check_branch
        %302 = sbr.rel (%p300) target = $region24
      $region23: #{gsnet_gcn_forward.1} parent=11 // pred_region
        _
      $region24: #{gsnet_gcn_forward.1} parent=11 // pred_fallthru
        _
      // Predicated region
      $region25: #{gsnet_gcn_forward.1} parent=11 // pred_check
        %p303 = pneg %p127
      $region26: #{gsnet_gcn_forward.1} parent=11 // pred_check_branch
        %305 = sbr.rel (%p303) target = $region28
      $region27: #{gsnet_gcn_forward.1} parent=11 // pred_region
        _
      $region28: #{gsnet_gcn_forward.1} parent=11 // pred_fallthru
        _
      // Predicated region
      $region29: #{gsnet_gcn_forward.1} parent=11 // pred_check
        %p306 = pneg %p148
      $region30: #{gsnet_gcn_forward.1} parent=11 // pred_check_branch
        %308 = sbr.rel (%p306) target = $region32
      $region31: #{gsnet_gcn_forward.1} parent=11 // pred_region
        _
      $region32: #{gsnet_gcn_forward.1} parent=11 // pred_fallthru
        _
      // Predicated region
      $region33: #{gsnet_gcn_forward.1} parent=11 // pred_check
        %p309 = pneg %p169
      $region34: #{gsnet_gcn_forward.1} parent=11 // pred_check_branch
        %311 = sbr.rel (%p309) target = $region36
      $region35: #{gsnet_gcn_forward.1} parent=11 // pred_region
        _
      $region36: #{gsnet_gcn_forward.1} parent=11 // pred_fallthru
        _
      // Predicated region
      $region37: #{gsnet_gcn_forward.1} parent=11 // pred_check
        %p312 = pneg %p190
      $region38: #{gsnet_gcn_forward.1} parent=11 // pred_check_branch
        %314 = sbr.rel (%p312) target = $region40
      $region39: #{gsnet_gcn_forward.1} parent=11 // pred_region
        _
      $region40: #{gsnet_gcn_forward.1} parent=11 // pred_fallthru
        _
      // Predicated region
      $region41: #{gsnet_gcn_forward.1} parent=11 // pred_check
        %p315 = pneg %p211
      $region42: #{gsnet_gcn_forward.1} parent=11 // pred_check_branch
        %317 = sbr.rel (%p315) target = $region44
      $region43: #{gsnet_gcn_forward.1} parent=11 // pred_region
        _
      $region44: #{gsnet_gcn_forward.1} parent=11 // pred_fallthru
        _
      // Predicated region
      $region45: #{gsnet_gcn_forward.1} parent=11 // pred_check
        %p318 = pneg %p232
      $region46: #{gsnet_gcn_forward.1} parent=11 // pred_check_branch
        %320 = sbr.rel (%p318) target = $region48
      $region47: #{gsnet_gcn_forward.1} parent=11 // pred_region
        _
      $region48: #{gsnet_gcn_forward.1} parent=11 // pred_fallthru
        _
      // Predicated region
      $region49: #{gsnet_gcn_forward.1} parent=11 // pred_check
        %p321 = pneg %p253
      $region50: #{gsnet_gcn_forward.1} parent=11 // pred_check_branch
        %323 = sbr.rel (%p321) target = $region52
      $region51: #{gsnet_gcn_forward.1} parent=11 // pred_region
        _
      $region52: #{gsnet_gcn_forward.1} parent=11 // pred_fallthru
        _
    $region12: #{gsnet_gcn_forward.1} parent=5 // pred_fallthru
      _
    %p324 = scmp.lt.s32.totalorder %s17, 2
    // Predicated region
    $region53: #{gsnet_gcn_forward.1} parent=5 // pred_check
      %p325 = pneg %p324
    $region54: #{gsnet_gcn_forward.1} parent=5 // pred_check_branch
      %327 = sbr.rel (%p325) target = $region56
    $region55: #{gsnet_gcn_forward.1} parent=5 // pred_region
      // Predicated region
      $region57: #{gsnet_gcn_forward.1} parent=55 // pred_check
        %p328 = pneg %p37
      $region58: #{gsnet_gcn_forward.1} parent=55 // pred_check_branch
        %330 = sbr.rel (%p328) target = $region60
      $region59: #{gsnet_gcn_forward.1} parent=55 // pred_region
        %p331 = scmp.lt.s32.totalorder %s17, 1
        %s332 = scalar_select %p331, %s17, 1
        %s333 = smul.addr %s332, 2
        %s334 = smul.addr %s333, 8
        %s335 = scalar_lea.vmem %s0, %s334
      $region60: #{gsnet_gcn_forward.1} parent=55 // pred_fallthru
        _
    $region56: #{gsnet_gcn_forward.1} parent=5 // pred_fallthru
      _
    %p336 = scmp.le.s32.totalorder 1, %s17
    %p337 = scmp.lt.s32.totalorder %s17, 3
    %p338 = pnand %p336, %p337
    %p339 = pneg %p338
    // Predicated region
    $region61: #{gsnet_gcn_forward.1} parent=5 // pred_check
      _
    $region62: #{gsnet_gcn_forward.1} parent=5 // pred_check_branch
      %341 = sbr.rel (%p338) target = $region64
    $region63: #{gsnet_gcn_forward.1} parent=5 // pred_region
      %s342 = ssub.s32 %s17, 1
      %p343 = scmp.lt.s32.totalorder %s22, 1
      %s344 = scalar_select %p343, %s22, 1
      %s345 = smul.addr %s344, 2
      %s346 = smul.addr %s345, 8
      %s347 = scalar_lea.vmem %s0, %s346
      %p348 = pneg %p43
      %p349 = pneg %p40
      %p350 = pneg %p64
      %p351 = pneg %p61
      %p352 = pneg %p85
      %p353 = pneg %p82
      %p354 = pneg %p106
      %p355 = pneg %p103
      %p356 = pneg %p127
      %p357 = pneg %p124
      %p358 = pneg %p148
      %p359 = pneg %p145
      %p360 = pneg %p169
      %p361 = pneg %p166
      %p362 = pneg %p190
      %p363 = pneg %p187
      %p364 = pneg %p211
      %p365 = pneg %p208
      %p366 = pneg %p232
      %p367 = pneg %p229
      %p368 = pneg %p253
      %p369 = pneg %p250
      %p370 = pneg %p279
      %p371 = pneg %p276
      %p372 = scmp.lt.s32.totalorder %s22, 1
      %s373 = scalar_select %p372, %s22, 1
      %s374 = smul.addr %s373, 2
      %s375 = smul.addr %s374, 8
      %s376 = scalar_lea.vmem %s11, %s375
      %p377 = scmp.lt.s32.totalorder %s22, 1
      %s378 = scalar_select %p377, %s22, 1
      %s379 = smul.addr %s378, 2
      %s380 = smul.addr %s379, 8
      %s381 = scalar_lea.vmem %s0, %s380
      %p382 = scmp.lt.s32.totalorder %s22, 1
      %s383 = scalar_select %p382, %s22, 1
      %s384 = smul.addr %s383, 2
      %s385 = smul.addr %s384, 8
      %s386 = scalar_lea.vmem %s11, %s385
      %v388 = vld [vmem:[%s1] sm:$0xf]
      %v389 = vld [vmem:[%s1 + $0x4] sm:$0xf]
      %v390 = vld [vmem:[%s8] sm:$0x7]
      %v391 = vld [vmem:[%s381] sm:$0xff]
      %v392 = vld [vmem:[%s381 + $0x8] sm:$0xff]
      %v393 = vld [vmem:[%s2] sm:$0x1]
      %v394 = vpack.c.bf16 %v392, %v391
      %v395 = vmul.f32 %v391, 0.3
      %v396 = vmul.f32 %v392, 0.3
      %v399 = vunpack.c.l.b16 %v388
      %v400 = vunpack.c.l.b16 %v389
      %v401 = vpack.c.b16 %v400, %v399
      %vm402 = vcmask 130048
      %v404 = vsel %vm402, %v401, 0
      %406 = vmatprep.subr.bf16.mxu0 0
      %407 = vmatpush1.bf16.msra.mxu0 0
      %408 = vmatprep.subr.bf16.mxu0 0
      %409 = vmatpush1.bf16.msra.mxu0 0
      %410 = vmatprep.subr.bf16.mxu0 0
      %411 = vmatpush1.bf16.msra.mxu0 0
      %412 = vmatprep.subr.bf16.mxu0 0
      %413 = vmatpush1.bf16.msra.mxu0 0
      %414 = vmatprep.subr.bf16.mxu0 0
      %415 = vmatpush1.bf16.msra.mxu0 0
      %416 = vmatprep.subr.bf16.mxu0 0
      %417 = vmatpush1.bf16.msra.mxu0 0
      %418 = vmatprep.subr.bf16.mxu0 0
      %419 = vmatpush1.bf16.msra.mxu0 0
      %420 = vmatprep.subr.bf16.mxu0 0
      %421 = vmatpush1.bf16.msra.mxu0 %v394
      %422 = vmatprep.subr.bf16.mxu0 0
      %423 = vmatpush2.bf16.msra.mxu0 0
      %424 = vmatprep.subr.bf16.mxu0 0
      %425 = vmatpush2.bf16.msra.mxu0 0
      %426 = vmatprep.subr.bf16.mxu0 0
      %427 = vmatpush2.bf16.msra.mxu0 0
      %428 = vmatprep.subr.bf16.mxu0 0
      %429 = vmatpush2.bf16.msra.mxu0 0
      %430 = vmatprep.subr.bf16.mxu0 0
      %431 = vmatpush2.bf16.msra.mxu0 0
      %432 = vmatprep.subr.bf16.mxu0 0
      %433 = vmatpush2.bf16.msra.mxu0 0
      %434 = vmatprep.subr.bf16.mxu0 0
      %435 = vmatpush2.bf16.msra.mxu0 0
      %436 = vmatprep.subr.bf16.mxu0 0
      %437 = vmatpush2.bf16.msra.mxu0 0
      %438 = vmatprep.mubr.bf16.mxu0 0
      %439 = vmatmul.mubr.bf16.gmra.mxu0 %v404
      %v440 = vpop.f32.mrf.mxu0
      %v441 = vadd.f32 %v395, %v440
      %v442 = vpop.f32.mrf.mxu0
      %v443 = vpop.f32.mrf.mxu0
      %v444 = vadd.f32 %v396, %v443
      %v445 = vpop.f32.mrf.mxu0
      %446 = vdwg.mxu0
      %v447 = vpack.c.bf16 %v444, %v441
      %v448 = vlaneseq
      %v449 = vshrl.u32 %v448, 7
      %v450 = vsub.s32 0, %v449
      %v451 = vrot.slane %v390, %v450
      %vm452 = vcmask 15360
      %v454 = vsel %vm452, %v447, 0
      %vm456 = vcmask 1040384
      %v458 = vsel %vm456, %v393, 0
      %460 = vmatprep.subr.bf16.mxu0 0
      %461 = vmatpush1.bf16.msra.mxu0 0
      %462 = vmatprep.subr.bf16.mxu0 0
      %463 = vmatpush1.bf16.msra.mxu0 0
      %464 = vmatprep.subr.bf16.mxu0 0
      %465 = vmatpush1.bf16.msra.mxu0 0
      %466 = vmatprep.subr.bf16.mxu0 0
      %467 = vmatpush1.bf16.msra.mxu0 0
      %468 = vmatprep.subr.bf16.mxu0 0
      %469 = vmatpush1.bf16.msra.mxu0 0
      %470 = vmatprep.subr.bf16.mxu0 0
      %471 = vmatpush1.bf16.msra.mxu0 0
      %472 = vmatprep.subr.bf16.mxu0 0
      %473 = vmatpush1.bf16.msra.mxu0 0
      %474 = vmatprep.subr.bf16.mxu0 0
      %475 = vmatpush1.bf16.msra.mxu0 %v458
      %476 = vmatprep.subr.bf16.mxu0 0
      %477 = vmatpush2.bf16.msra.mxu0 0
      %478 = vmatprep.subr.bf16.mxu0 0
      %479 = vmatpush2.bf16.msra.mxu0 0
      %480 = vmatprep.subr.bf16.mxu0 0
      %481 = vmatpush2.bf16.msra.mxu0 0
      %482 = vmatprep.subr.bf16.mxu0 0
      %483 = vmatpush2.bf16.msra.mxu0 0
      %484 = vmatprep.subr.bf16.mxu0 0
      %485 = vmatpush2.bf16.msra.mxu0 0
      %486 = vmatprep.subr.bf16.mxu0 0
      %487 = vmatpush2.bf16.msra.mxu0 0
      %488 = vmatprep.subr.bf16.mxu0 0
      %489 = vmatpush2.bf16.msra.mxu0 0
      %490 = vmatprep.subr.bf16.mxu0 0
      %491 = vmatpush2.bf16.msra.mxu0 0
      %492 = vmatprep.mubr.bf16.mxu0 0
      %493 = vmatmul.mubr.bf16.gmra.mxu0 %v454
      %v494 = vpop.f32.mrf.mxu0
      %v495 = vadd.f32 %v451, %v494
      %v496 = vpop.f32.mrf.mxu0
      %v497 = vpop.f32.mrf.mxu0
      %v498 = vadd.f32 %v451, %v497
      %v499 = vpop.f32.mrf.mxu0
      %500 = vdwg.mxu0
      %v501 = vmul.f32 %v495, 0.5
      %v502 = vmul.f32 %v498, 0.5
      %v503 = vmul.f32 %v495, 0.044715
      %v504 = vmul.f32 %v498, 0.044715
      %v505 = vmul.f32 %v503, %v495
      %v506 = vmul.f32 %v504, %v498
      %v507 = vmul.f32 %v505, %v495
      %v508 = vmul.f32 %v506, %v498
      %v509 = vadd.f32 %v495, %v507
      %v510 = vadd.f32 %v498, %v508
      %v511 = vmul.f32 %v509, 0.7978846
      %v512 = vmul.f32 %v510, 0.7978846
      %v513 = vtanh.pop %v511
      %v514 = vtanh.pop %v512
      %v515 = vadd.f32 %v513, 1.0
      %v516 = vadd.f32 %v514, 1.0
      %v517 = vmul.f32 %v501, %v515
      %v518 = vmul.f32 %v502, %v516
      %v519 = vld [vmem:[%s4] sm:$0xf]
      %v520 = vld [vmem:[%s3] sm:$0xf]
      %v521 = vld [vmem:[%s3 + $0x4] sm:$0xf]
      %v522 = vld [vmem:[%s3 + $0x8] sm:$0xf]
      %v523 = vld [vmem:[%s3 + $0xc] sm:$0xf]
      %v524 = vpack.c.bf16 %v518, %v517
      %v525 = vmul.f32 %v517, 0.3
      %v526 = vmul.f32 %v518, 0.3
      %527 = vmatprep.subr.bf16.mxu0 0
      %528 = vmatpush1.bf16.msra.mxu0 0
      %529 = vmatprep.subr.bf16.mxu0 0
      %530 = vmatpush1.bf16.msra.mxu0 0
      %531 = vmatprep.subr.bf16.mxu0 0
      %532 = vmatpush1.bf16.msra.mxu0 0
      %533 = vmatprep.subr.bf16.mxu0 0
      %534 = vmatpush1.bf16.msra.mxu0 0
      %535 = vmatprep.subr.bf16.mxu0 0
      %536 = vmatpush1.bf16.msra.mxu0 0
      %537 = vmatprep.subr.bf16.mxu0 0
      %538 = vmatpush1.bf16.msra.mxu0 0
      %539 = vmatprep.subr.bf16.mxu0 0
      %540 = vmatpush1.bf16.msra.mxu0 0
      %541 = vmatprep.subr.bf16.mxu0 0
      %542 = vmatpush1.bf16.msra.mxu0 %v524
      %543 = vmatprep.subr.bf16.mxu0 0
      %544 = vmatpush2.bf16.msra.mxu0 0
      %545 = vmatprep.subr.bf16.mxu0 0
      %546 = vmatpush2.bf16.msra.mxu0 0
      %547 = vmatprep.subr.bf16.mxu0 0
      %548 = vmatpush2.bf16.msra.mxu0 0
      %549 = vmatprep.subr.bf16.mxu0 0
      %550 = vmatpush2.bf16.msra.mxu0 0
      %551 = vmatprep.subr.bf16.mxu0 0
      %552 = vmatpush2.bf16.msra.mxu0 0
      %553 = vmatprep.subr.bf16.mxu0 0
      %554 = vmatpush2.bf16.msra.mxu0 0
      %555 = vmatprep.subr.bf16.mxu0 0
      %556 = vmatpush2.bf16.msra.mxu0 0
      %557 = vmatprep.subr.bf16.mxu0 0
      %558 = vmatpush2.bf16.msra.mxu0 0
      %559 = vmatprep.mubr.bf16.mxu0 0
      %560 = vmatmul.mubr.bf16.gmra.mxu0 %v404
      %v561 = vpop.f32.mrf.mxu0
      %v562 = vadd.f32 %v525, %v561
      %v563 = vpop.f32.mrf.mxu0
      %v564 = vpop.f32.mrf.mxu0
      %v565 = vadd.f32 %v526, %v564
      %v566 = vpop.f32.mrf.mxu0
      %567 = vdwg.mxu0
      %v568 = vpack.c.bf16 %v565, %v562
      %v569 = vlaneseq
      %v570 = vshrl.u32 %v569, 7
      %v571 = vsub.s32 0, %v570
      %v572 = vrot.slane %v519, %v571
      %v577 = vunpack.c.l.b16 %v520
      %v578 = vunpack.c.l.b16 %v521
      %v579 = vunpack.c.l.b16 %v522
      %v580 = vunpack.c.l.b16 %v523
      %v581 = vpack.c.b16 %v578, %v577
      %v582 = vpack.c.b16 %v580, %v579
      %vm585 = vcmask 261120
      %v587 = vsel %vm585, %v568, 0
      %589 = vmatprep.subr.bf16.mxu0 0
      %590 = vmatpush1.bf16.msra.mxu0 0
      %591 = vmatprep.subr.bf16.mxu0 0
      %592 = vmatpush1.bf16.msra.mxu0 0
      %593 = vmatprep.subr.bf16.mxu0 0
      %594 = vmatpush1.bf16.msra.mxu0 0
      %595 = vmatprep.subr.bf16.mxu0 0
      %596 = vmatpush1.bf16.msra.mxu0 0
      %597 = vmatprep.subr.bf16.mxu0 0
      %598 = vmatpush1.bf16.msra.mxu0 0
      %599 = vmatprep.subr.bf16.mxu0 0
      %600 = vmatpush1.bf16.msra.mxu0 0
      %601 = vmatprep.subr.bf16.mxu0 0
      %602 = vmatpush1.bf16.msra.mxu0 %v582
      %603 = vmatprep.subr.bf16.mxu0 0
      %604 = vmatpush1.bf16.msra.mxu0 %v581
      %605 = vmatprep.subr.bf16.mxu0 0
      %606 = vmatpush2.bf16.msra.mxu0 0
      %607 = vmatprep.subr.bf16.mxu0 0
      %608 = vmatpush2.bf16.msra.mxu0 0
      %609 = vmatprep.subr.bf16.mxu0 0
      %610 = vmatpush2.bf16.msra.mxu0 0
      %611 = vmatprep.subr.bf16.mxu0 0
      %612 = vmatpush2.bf16.msra.mxu0 0
      %613 = vmatprep.subr.bf16.mxu0 0
      %614 = vmatpush2.bf16.msra.mxu0 0
      %615 = vmatprep.subr.bf16.mxu0 0
      %616 = vmatpush2.bf16.msra.mxu0 0
      %617 = vmatprep.subr.bf16.mxu0 0
      %618 = vmatpush2.bf16.msra.mxu0 0
      %619 = vmatprep.subr.bf16.mxu0 0
      %620 = vmatpush2.bf16.msra.mxu0 0
      %621 = vmatprep.mubr.bf16.mxu0 0
      %622 = vmatmul.mubr.bf16.gmra.mxu0 %v587
      %v623 = vpop.f32.mrf.mxu0
      %v624 = vadd.f32 %v572, %v623
      %v625 = vpop.f32.mrf.mxu0
      %v626 = vpop.f32.mrf.mxu0
      %v627 = vadd.f32 %v572, %v626
      %v628 = vpop.f32.mrf.mxu0
      %629 = vdwg.mxu0
      %v630 = vsel %vm585, %v624, 0.0
      %631 = vadd.xlane.f32.xlu0 %v630
      %v632 = vpop.xlane.xlu0 %631
      %v633 = vsel %vm585, %v627, 0.0
      %634 = vadd.xlane.f32.xlu0 %v633
      %v635 = vpop.xlane.xlu0 %634
      %v636 = vrcp.pop 32.0
      %v637 = vmul.f32 %v632, %v636
      %v638 = vmul.f32 %v635, %v636
      %v639 = vmul.f32 %v624, %v624
      %v640 = vmul.f32 %v627, %v627
      %v641 = vsel %vm585, %v639, 0.0
      %642 = vadd.xlane.f32.xlu0 %v641
      %v643 = vpop.xlane.xlu0 %642
      %v644 = vsel %vm585, %v640, 0.0
      %645 = vadd.xlane.f32.xlu0 %v644
      %v646 = vpop.xlane.xlu0 %645
      %v647 = vmul.f32 %v643, %v636
      %v648 = vmul.f32 %v646, %v636
      %v649 = vmul.f32 %v637, %v637
      %v650 = vmul.f32 %v638, %v638
      %v651 = vsub.f32 %v647, %v649
      %v652 = vsub.f32 %v648, %v650
      %v653 = vsub.f32 %v624, %v637
      %v654 = vsub.f32 %v627, %v638
      %v655 = vadd.f32 %v651, 1e-05
      %v656 = vadd.f32 %v652, 1e-05
      %v657 = vrsqrt.pop %v655
      %v658 = vrsqrt.pop %v656
      %v659 = vmul.f32 %v653, %v657
      %v660 = vmul.f32 %v654, %v658
      %v661 = vlaneseq
      %v662 = vshrl.u32 %v661, 7
      %v663 = vsub.s32 1, %v662
      %v664 = vrot.slane %v519, %v663
      %v665 = vmul.f32 %v659, %v664
      %v666 = vmul.f32 %v660, %v664
      %v667 = vlaneseq
      %v668 = vshrl.u32 %v667, 7
      %v669 = vsub.s32 2, %v668
      %v670 = vrot.slane %v519, %v669
      %v671 = vadd.f32 %v665, %v670
      %v672 = vadd.f32 %v666, %v670
      %s673 = scalar_lea.vmem %s3, 16
      %v674 = vld [vmem:[%s673] sm:$0xf]
      %v675 = vld [vmem:[%s673 + $0x4] sm:$0xf]
      %v676 = vld [vmem:[%s673 + $0x8] sm:$0xf]
      %v677 = vld [vmem:[%s673 + $0xc] sm:$0xf]
      %v678 = vpack.c.bf16 %v672, %v671
      %679 = vmatprep.subr.bf16.mxu0 0
      %680 = vmatpush1.bf16.msra.mxu0 0
      %681 = vmatprep.subr.bf16.mxu0 0
      %682 = vmatpush1.bf16.msra.mxu0 0
      %683 = vmatprep.subr.bf16.mxu0 0
      %684 = vmatpush1.bf16.msra.mxu0 0
      %685 = vmatprep.subr.bf16.mxu0 0
      %686 = vmatpush1.bf16.msra.mxu0 0
      %687 = vmatprep.subr.bf16.mxu0 0
      %688 = vmatpush1.bf16.msra.mxu0 0
      %689 = vmatprep.subr.bf16.mxu0 0
      %690 = vmatpush1.bf16.msra.mxu0 0
      %691 = vmatprep.subr.bf16.mxu0 0
      %692 = vmatpush1.bf16.msra.mxu0 0
      %693 = vmatprep.subr.bf16.mxu0 0
      %694 = vmatpush1.bf16.msra.mxu0 %v678
      %695 = vmatprep.subr.bf16.mxu0 0
      %696 = vmatpush2.bf16.msra.mxu0 0
      %697 = vmatprep.subr.bf16.mxu0 0
      %698 = vmatpush2.bf16.msra.mxu0 0
      %699 = vmatprep.subr.bf16.mxu0 0
      %700 = vmatpush2.bf16.msra.mxu0 0
      %701 = vmatprep.subr.bf16.mxu0 0
      %702 = vmatpush2.bf16.msra.mxu0 0
      %703 = vmatprep.subr.bf16.mxu0 0
      %704 = vmatpush2.bf16.msra.mxu0 0
      %705 = vmatprep.subr.bf16.mxu0 0
      %706 = vmatpush2.bf16.msra.mxu0 0
      %707 = vmatprep.subr.bf16.mxu0 0
      %708 = vmatpush2.bf16.msra.mxu0 0
      %709 = vmatprep.subr.bf16.mxu0 0
      %710 = vmatpush2.bf16.msra.mxu0 0
      %711 = vmatprep.mubr.bf16.mxu0 0
      %712 = vmatmul.mubr.bf16.gmra.mxu0 %v404
      %v713 = vpop.f32.mrf.mxu0
      %v714 = vadd.f32 %v525, %v713
      %v715 = vpop.f32.mrf.mxu0
      %v716 = vpop.f32.mrf.mxu0
      %v717 = vadd.f32 %v526, %v716
      %v718 = vpop.f32.mrf.mxu0
      %719 = vdwg.mxu0
      %v720 = vpack.c.bf16 %v717, %v714
      %v721 = vlaneseq
      %v722 = vshrl.u32 %v721, 7
      %v723 = vsub.s32 3, %v722
      %v724 = vrot.slane %v519, %v723
      %v729 = vunpack.c.l.b16 %v674
      %v730 = vunpack.c.l.b16 %v675
      %v731 = vunpack.c.l.b16 %v676
      %v732 = vunpack.c.l.b16 %v677
      %v733 = vpack.c.b16 %v730, %v729
      %v734 = vpack.c.b16 %v732, %v731
      %v738 = vsel %vm585, %v720, 0
      %740 = vmatprep.subr.bf16.mxu0 0
      %741 = vmatpush1.bf16.msra.mxu0 0
      %742 = vmatprep.subr.bf16.mxu0 0
      %743 = vmatpush1.bf16.msra.mxu0 0
      %744 = vmatprep.subr.bf16.mxu0 0
      %745 = vmatpush1.bf16.msra.mxu0 0
      %746 = vmatprep.subr.bf16.mxu0 0
      %747 = vmatpush1.bf16.msra.mxu0 0
      %748 = vmatprep.subr.bf16.mxu0 0
      %749 = vmatpush1.bf16.msra.mxu0 0
      %750 = vmatprep.subr.bf16.mxu0 0
      %751 = vmatpush1.bf16.msra.mxu0 0
      %752 = vmatprep.subr.bf16.mxu0 0
      %753 = vmatpush1.bf16.msra.mxu0 %v734
      %754 = vmatprep.subr.bf16.mxu0 0
      %755 = vmatpush1.bf16.msra.mxu0 %v733
      %756 = vmatprep.subr.bf16.mxu0 0
      %757 = vmatpush2.bf16.msra.mxu0 0
      %758 = vmatprep.subr.bf16.mxu0 0
      %759 = vmatpush2.bf16.msra.mxu0 0
      %760 = vmatprep.subr.bf16.mxu0 0
      %761 = vmatpush2.bf16.msra.mxu0 0
      %762 = vmatprep.subr.bf16.mxu0 0
      %763 = vmatpush2.bf16.msra.mxu0 0
      %764 = vmatprep.subr.bf16.mxu0 0
      %765 = vmatpush2.bf16.msra.mxu0 0
      %766 = vmatprep.subr.bf16.mxu0 0
      %767 = vmatpush2.bf16.msra.mxu0 0
      %768 = vmatprep.subr.bf16.mxu0 0
      %769 = vmatpush2.bf16.msra.mxu0 0
      %770 = vmatprep.subr.bf16.mxu0 0
      %771 = vmatpush2.bf16.msra.mxu0 0
      %772 = vmatprep.mubr.bf16.mxu0 0
      %773 = vmatmul.mubr.bf16.gmra.mxu0 %v738
      %v774 = vpop.f32.mrf.mxu0
      %v775 = vadd.f32 %v724, %v774
      %v776 = vpop.f32.mrf.mxu0
      %v777 = vpop.f32.mrf.mxu0
      %v778 = vadd.f32 %v724, %v777
      %v779 = vpop.f32.mrf.mxu0
      %780 = vdwg.mxu0
      %v781 = vmul.f32 %v775, 0.5
      %v782 = vmul.f32 %v778, 0.5
      %v783 = vmul.f32 %v775, 0.044715
      %v784 = vmul.f32 %v778, 0.044715
      %v785 = vmul.f32 %v783, %v775
      %v786 = vmul.f32 %v784, %v778
      %v787 = vmul.f32 %v785, %v775
      %v788 = vmul.f32 %v786, %v778
      %v789 = vadd.f32 %v775, %v787
      %v790 = vadd.f32 %v778, %v788
      %v791 = vmul.f32 %v789, 0.7978846
      %v792 = vmul.f32 %v790, 0.7978846
      %v793 = vtanh.pop %v791
      %v794 = vtanh.pop %v792
      %v795 = vadd.f32 %v793, 1.0
      %v796 = vadd.f32 %v794, 1.0
      %v797 = vmul.f32 %v781, %v795
      %v798 = vmul.f32 %v782, %v796
      %v799 = vadd.f32 %v517, %v797
      %v800 = vadd.f32 %v518, %v798
      %s801 = scalar_lea.vmem %s4, 4
      %v802 = vld [vmem:[%s801] sm:$0xf]
      %s803 = scalar_lea.vmem %s3, 32
      %v804 = vld [vmem:[%s803] sm:$0xf]
      %v805 = vld [vmem:[%s803 + $0x4] sm:$0xf]
      %v806 = vld [vmem:[%s803 + $0x8] sm:$0xf]
      %v807 = vld [vmem:[%s803 + $0xc] sm:$0xf]
      %v808 = vpack.c.bf16 %v800, %v799
      %v809 = vmul.f32 %v799, 0.3
      %v810 = vmul.f32 %v800, 0.3
      %811 = vmatprep.subr.bf16.mxu0 0
      %812 = vmatpush1.bf16.msra.mxu0 0
      %813 = vmatprep.subr.bf16.mxu0 0
      %814 = vmatpush1.bf16.msra.mxu0 0
      %815 = vmatprep.subr.bf16.mxu0 0
      %816 = vmatpush1.bf16.msra.mxu0 0
      %817 = vmatprep.subr.bf16.mxu0 0
      %818 = vmatpush1.bf16.msra.mxu0 0
      %819 = vmatprep.subr.bf16.mxu0 0
      %820 = vmatpush1.bf16.msra.mxu0 0
      %821 = vmatprep.subr.bf16.mxu0 0
      %822 = vmatpush1.bf16.msra.mxu0 0
      %823 = vmatprep.subr.bf16.mxu0 0
      %824 = vmatpush1.bf16.msra.mxu0 0
      %825 = vmatprep.subr.bf16.mxu0 0
      %826 = vmatpush1.bf16.msra.mxu0 %v808
      %827 = vmatprep.subr.bf16.mxu0 0
      %828 = vmatpush2.bf16.msra.mxu0 0
      %829 = vmatprep.subr.bf16.mxu0 0
      %830 = vmatpush2.bf16.msra.mxu0 0
      %831 = vmatprep.subr.bf16.mxu0 0
      %832 = vmatpush2.bf16.msra.mxu0 0
      %833 = vmatprep.subr.bf16.mxu0 0
      %834 = vmatpush2.bf16.msra.mxu0 0
      %835 = vmatprep.subr.bf16.mxu0 0
      %836 = vmatpush2.bf16.msra.mxu0 0
      %837 = vmatprep.subr.bf16.mxu0 0
      %838 = vmatpush2.bf16.msra.mxu0 0
      %839 = vmatprep.subr.bf16.mxu0 0
      %840 = vmatpush2.bf16.msra.mxu0 0
      %841 = vmatprep.subr.bf16.mxu0 0
      %842 = vmatpush2.bf16.msra.mxu0 0
      %843 = vmatprep.mubr.bf16.mxu0 0
      %844 = vmatmul.mubr.bf16.gmra.mxu0 %v404
      %v845 = vpop.f32.mrf.mxu0
      %v846 = vadd.f32 %v809, %v845
      %v847 = vpop.f32.mrf.mxu0
      %v848 = vpop.f32.mrf.mxu0
      %v849 = vadd.f32 %v810, %v848
      %v850 = vpop.f32.mrf.mxu0
      %851 = vdwg.mxu0
      %v852 = vpack.c.bf16 %v849, %v846
      %v853 = vlaneseq
      %v854 = vshrl.u32 %v853, 7
      %v855 = vsub.s32 0, %v854
      %v856 = vrot.slane %v802, %v855
      %v861 = vunpack.c.l.b16 %v804
      %v862 = vunpack.c.l.b16 %v805
      %v863 = vunpack.c.l.b16 %v806
      %v864 = vunpack.c.l.b16 %v807
      %v865 = vpack.c.b16 %v862, %v861
      %v866 = vpack.c.b16 %v864, %v863
      %v870 = vsel %vm585, %v852, 0
      %872 = vmatprep.subr.bf16.mxu0 0
      %873 = vmatpush1.bf16.msra.mxu0 0
      %874 = vmatprep.subr.bf16.mxu0 0
      %875 = vmatpush1.bf16.msra.mxu0 0
      %876 = vmatprep.subr.bf16.mxu0 0
      %877 = vmatpush1.bf16.msra.mxu0 0
      %878 = vmatprep.subr.bf16.mxu0 0
      %879 = vmatpush1.bf16.msra.mxu0 0
      %880 = vmatprep.subr.bf16.mxu0 0
      %881 = vmatpush1.bf16.msra.mxu0 0
      %882 = vmatprep.subr.bf16.mxu0 0
      %883 = vmatpush1.bf16.msra.mxu0 0
      %884 = vmatprep.subr.bf16.mxu0 0
      %885 = vmatpush1.bf16.msra.mxu0 %v866
      %886 = vmatprep.subr.bf16.mxu0 0
      %887 = vmatpush1.bf16.msra.mxu0 %v865
      %888 = vmatprep.subr.bf16.mxu0 0
      %889 = vmatpush2.bf16.msra.mxu0 0
      %890 = vmatprep.subr.bf16.mxu0 0
      %891 = vmatpush2.bf16.msra.mxu0 0
      %892 = vmatprep.subr.bf16.mxu0 0
      %893 = vmatpush2.bf16.msra.mxu0 0
      %894 = vmatprep.subr.bf16.mxu0 0
      %895 = vmatpush2.bf16.msra.mxu0 0
      %896 = vmatprep.subr.bf16.mxu0 0
      %897 = vmatpush2.bf16.msra.mxu0 0
      %898 = vmatprep.subr.bf16.mxu0 0
      %899 = vmatpush2.bf16.msra.mxu0 0
      %900 = vmatprep.subr.bf16.mxu0 0
      %901 = vmatpush2.bf16.msra.mxu0 0
      %902 = vmatprep.subr.bf16.mxu0 0
      %903 = vmatpush2.bf16.msra.mxu0 0
      %904 = vmatprep.mubr.bf16.mxu0 0
      %905 = vmatmul.mubr.bf16.gmra.mxu0 %v870
      %v906 = vpop.f32.mrf.mxu0
      %v907 = vadd.f32 %v856, %v906
      %v908 = vpop.f32.mrf.mxu0
      %v909 = vpop.f32.mrf.mxu0
      %v910 = vadd.f32 %v856, %v909
      %v911 = vpop.f32.mrf.mxu0
      %912 = vdwg.mxu0
      %v913 = vsel %vm585, %v907, 0.0
      %914 = vadd.xlane.f32.xlu0 %v913
      %v915 = vpop.xlane.xlu0 %914
      %v916 = vsel %vm585, %v910, 0.0
      %917 = vadd.xlane.f32.xlu0 %v916
      %v918 = vpop.xlane.xlu0 %917
      %v919 = vmul.f32 %v915, %v636
      %v920 = vmul.f32 %v918, %v636
      %v921 = vmul.f32 %v907, %v907
      %v922 = vmul.f32 %v910, %v910
      %v923 = vsel %vm585, %v921, 0.0
      %924 = vadd.xlane.f32.xlu0 %v923
      %v925 = vpop.xlane.xlu0 %924
      %v926 = vsel %vm585, %v922, 0.0
      %927 = vadd.xlane.f32.xlu0 %v926
      %v928 = vpop.xlane.xlu0 %927
      %v929 = vmul.f32 %v925, %v636
      %v930 = vmul.f32 %v928, %v636
      %v931 = vmul.f32 %v919, %v919
      %v932 = vmul.f32 %v920, %v920
      %v933 = vsub.f32 %v929, %v931
      %v934 = vsub.f32 %v930, %v932
      %v935 = vsub.f32 %v907, %v919
      %v936 = vsub.f32 %v910, %v920
      %v937 = vadd.f32 %v933, 1e-05
      %v938 = vadd.f32 %v934, 1e-05
      %v939 = vrsqrt.pop %v937
      %v940 = vrsqrt.pop %v938
      %v941 = vmul.f32 %v935, %v939
      %v942 = vmul.f32 %v936, %v940
      %v943 = vlaneseq
      %v944 = vshrl.u32 %v943, 7
      %v945 = vsub.s32 1, %v944
      %v946 = vrot.slane %v802, %v945
      %v947 = vmul.f32 %v941, %v946
      %v948 = vmul.f32 %v942, %v946
      %v949 = vlaneseq
      %v950 = vshrl.u32 %v949, 7
      %v951 = vsub.s32 2, %v950
      %v952 = vrot.slane %v802, %v951
      %v953 = vadd.f32 %v947, %v952
      %v954 = vadd.f32 %v948, %v952
      %s955 = scalar_lea.vmem %s3, 48
      %v956 = vld [vmem:[%s955] sm:$0xf]
      %v957 = vld [vmem:[%s955 + $0x4] sm:$0xf]
      %v958 = vld [vmem:[%s955 + $0x8] sm:$0xf]
      %v959 = vld [vmem:[%s955 + $0xc] sm:$0xf]
      %v960 = vpack.c.bf16 %v954, %v953
      %961 = vmatprep.subr.bf16.mxu0 0
      %962 = vmatpush1.bf16.msra.mxu0 0
      %963 = vmatprep.subr.bf16.mxu0 0
      %964 = vmatpush1.bf16.msra.mxu0 0
      %965 = vmatprep.subr.bf16.mxu0 0
      %966 = vmatpush1.bf16.msra.mxu0 0
      %967 = vmatprep.subr.bf16.mxu0 0
      %968 = vmatpush1.bf16.msra.mxu0 0
      %969 = vmatprep.subr.bf16.mxu0 0
      %970 = vmatpush1.bf16.msra.mxu0 0
      %971 = vmatprep.subr.bf16.mxu0 0
      %972 = vmatpush1.bf16.msra.mxu0 0
      %973 = vmatprep.subr.bf16.mxu0 0
      %974 = vmatpush1.bf16.msra.mxu0 0
      %975 = vmatprep.subr.bf16.mxu0 0
      %976 = vmatpush1.bf16.msra.mxu0 %v960
      %977 = vmatprep.subr.bf16.mxu0 0
      %978 = vmatpush2.bf16.msra.mxu0 0
      %979 = vmatprep.subr.bf16.mxu0 0
      %980 = vmatpush2.bf16.msra.mxu0 0
      %981 = vmatprep.subr.bf16.mxu0 0
      %982 = vmatpush2.bf16.msra.mxu0 0
      %983 = vmatprep.subr.bf16.mxu0 0
      %984 = vmatpush2.bf16.msra.mxu0 0
      %985 = vmatprep.subr.bf16.mxu0 0
      %986 = vmatpush2.bf16.msra.mxu0 0
      %987 = vmatprep.subr.bf16.mxu0 0
      %988 = vmatpush2.bf16.msra.mxu0 0
      %989 = vmatprep.subr.bf16.mxu0 0
      %990 = vmatpush2.bf16.msra.mxu0 0
      %991 = vmatprep.subr.bf16.mxu0 0
      %992 = vmatpush2.bf16.msra.mxu0 0
      %993 = vmatprep.mubr.bf16.mxu0 0
      %994 = vmatmul.mubr.bf16.gmra.mxu0 %v404
      %v995 = vpop.f32.mrf.mxu0
      %v996 = vadd.f32 %v809, %v995
      %v997 = vpop.f32.mrf.mxu0
      %v998 = vpop.f32.mrf.mxu0
      %v999 = vadd.f32 %v810, %v998
      %v1000 = vpop.f32.mrf.mxu0
      %1001 = vdwg.mxu0
      %v1002 = vpack.c.bf16 %v999, %v996
      %v1003 = vlaneseq
      %v1004 = vshrl.u32 %v1003, 7
      %v1005 = vsub.s32 3, %v1004
      %v1006 = vrot.slane %v802, %v1005
      %v1011 = vunpack.c.l.b16 %v956
      %v1012 = vunpack.c.l.b16 %v957
      %v1013 = vunpack.c.l.b16 %v958
      %v1014 = vunpack.c.l.b16 %v959
      %v1015 = vpack.c.b16 %v1012, %v1011
      %v1016 = vpack.c.b16 %v1014, %v1013
      %v1020 = vsel %vm585, %v1002, 0
      %1022 = vmatprep.subr.bf16.mxu0 0
      %1023 = vmatpush1.bf16.msra.mxu0 0
      %1024 = vmatprep.subr.bf16.mxu0 0
      %1025 = vmatpush1.bf16.msra.mxu0 0
      %1026 = vmatprep.subr.bf16.mxu0 0
      %1027 = vmatpush1.bf16.msra.mxu0 0
      %1028 = vmatprep.subr.bf16.mxu0 0
      %1029 = vmatpush1.bf16.msra.mxu0 0
      %1030 = vmatprep.subr.bf16.mxu0 0
      %1031 = vmatpush1.bf16.msra.mxu0 0
      %1032 = vmatprep.subr.bf16.mxu0 0
      %1033 = vmatpush1.bf16.msra.mxu0 0
      %1034 = vmatprep.subr.bf16.mxu0 0
      %1035 = vmatpush1.bf16.msra.mxu0 %v1016
      %1036 = vmatprep.subr.bf16.mxu0 0
      %1037 = vmatpush1.bf16.msra.mxu0 %v1015
      %1038 = vmatprep.subr.bf16.mxu0 0
      %1039 = vmatpush2.bf16.msra.mxu0 0
      %1040 = vmatprep.subr.bf16.mxu0 0
      %1041 = vmatpush2.bf16.msra.mxu0 0
      %1042 = vmatprep.subr.bf16.mxu0 0
      %1043 = vmatpush2.bf16.msra.mxu0 0
      %1044 = vmatprep.subr.bf16.mxu0 0
      %1045 = vmatpush2.bf16.msra.mxu0 0
      %1046 = vmatprep.subr.bf16.mxu0 0
      %1047 = vmatpush2.bf16.msra.mxu0 0
      %1048 = vmatprep.subr.bf16.mxu0 0
      %1049 = vmatpush2.bf16.msra.mxu0 0
      %1050 = vmatprep.subr.bf16.mxu0 0
      %1051 = vmatpush2.bf16.msra.mxu0 0
      %1052 = vmatprep.subr.bf16.mxu0 0
      %1053 = vmatpush2.bf16.msra.mxu0 0
      %1054 = vmatprep.mubr.bf16.mxu0 0
      %1055 = vmatmul.mubr.bf16.gmra.mxu0 %v1020
      %v1056 = vpop.f32.mrf.mxu0
      %v1057 = vadd.f32 %v1006, %v1056
      %v1058 = vpop.f32.mrf.mxu0
      %v1059 = vpop.f32.mrf.mxu0
      %v1060 = vadd.f32 %v1006, %v1059
      %v1061 = vpop.f32.mrf.mxu0
      %1062 = vdwg.mxu0
      %v1063 = vmul.f32 %v1057, 0.5
      %v1064 = vmul.f32 %v1060, 0.5
      %v1065 = vmul.f32 %v1057, 0.044715
      %v1066 = vmul.f32 %v1060, 0.044715
      %v1067 = vmul.f32 %v1065, %v1057
      %v1068 = vmul.f32 %v1066, %v1060
      %v1069 = vmul.f32 %v1067, %v1057
      %v1070 = vmul.f32 %v1068, %v1060
      %v1071 = vadd.f32 %v1057, %v1069
      %v1072 = vadd.f32 %v1060, %v1070
      %v1073 = vmul.f32 %v1071, 0.7978846
      %v1074 = vmul.f32 %v1072, 0.7978846
      %v1075 = vtanh.pop %v1073
      %v1076 = vtanh.pop %v1074
      %v1077 = vadd.f32 %v1075, 1.0
      %v1078 = vadd.f32 %v1076, 1.0
      %v1079 = vmul.f32 %v1063, %v1077
      %v1080 = vmul.f32 %v1064, %v1078
      %v1081 = vadd.f32 %v799, %v1079
      %v1082 = vadd.f32 %v800, %v1080
      %s1083 = scalar_lea.vmem %s4, 8
      %v1084 = vld [vmem:[%s1083] sm:$0xf]
      %s1085 = scalar_lea.vmem %s3, 64
      %v1086 = vld [vmem:[%s1085] sm:$0xf]
      %v1087 = vld [vmem:[%s1085 + $0x4] sm:$0xf]
      %v1088 = vld [vmem:[%s1085 + $0x8] sm:$0xf]
      %v1089 = vld [vmem:[%s1085 + $0xc] sm:$0xf]
      %v1090 = vpack.c.bf16 %v1082, %v1081
      %v1091 = vmul.f32 %v1081, 0.3
      %v1092 = vmul.f32 %v1082, 0.3
      %1093 = vmatprep.subr.bf16.mxu0 0
      %1094 = vmatpush1.bf16.msra.mxu0 0
      %1095 = vmatprep.subr.bf16.mxu0 0
      %1096 = vmatpush1.bf16.msra.mxu0 0
      %1097 = vmatprep.subr.bf16.mxu0 0
      %1098 = vmatpush1.bf16.msra.mxu0 0
      %1099 = vmatprep.subr.bf16.mxu0 0
      %1100 = vmatpush1.bf16.msra.mxu0 0
      %1101 = vmatprep.subr.bf16.mxu0 0
      %1102 = vmatpush1.bf16.msra.mxu0 0
      %1103 = vmatprep.subr.bf16.mxu0 0
      %1104 = vmatpush1.bf16.msra.mxu0 0
      %1105 = vmatprep.subr.bf16.mxu0 0
      %1106 = vmatpush1.bf16.msra.mxu0 0
      %1107 = vmatprep.subr.bf16.mxu0 0
      %1108 = vmatpush1.bf16.msra.mxu0 %v1090
      %1109 = vmatprep.subr.bf16.mxu0 0
      %1110 = vmatpush2.bf16.msra.mxu0 0
      %1111 = vmatprep.subr.bf16.mxu0 0
      %1112 = vmatpush2.bf16.msra.mxu0 0
      %1113 = vmatprep.subr.bf16.mxu0 0
      %1114 = vmatpush2.bf16.msra.mxu0 0
      %1115 = vmatprep.subr.bf16.mxu0 0
      %1116 = vmatpush2.bf16.msra.mxu0 0
      %1117 = vmatprep.subr.bf16.mxu0 0
      %1118 = vmatpush2.bf16.msra.mxu0 0
      %1119 = vmatprep.subr.bf16.mxu0 0
      %1120 = vmatpush2.bf16.msra.mxu0 0
      %1121 = vmatprep.subr.bf16.mxu0 0
      %1122 = vmatpush2.bf16.msra.mxu0 0
      %1123 = vmatprep.subr.bf16.mxu0 0
      %1124 = vmatpush2.bf16.msra.mxu0 0
      %1125 = vmatprep.mubr.bf16.mxu0 0
      %1126 = vmatmul.mubr.bf16.gmra.mxu0 %v404
      %v1127 = vpop.f32.mrf.mxu0
      %v1128 = vadd.f32 %v1091, %v1127
      %v1129 = vpop.f32.mrf.mxu0
      %v1130 = vpop.f32.mrf.mxu0
      %v1131 = vadd.f32 %v1092, %v1130
      %v1132 = vpop.f32.mrf.mxu0
      %1133 = vdwg.mxu0
      %v1134 = vpack.c.bf16 %v1131, %v1128
      %v1135 = vlaneseq
      %v1136 = vshrl.u32 %v1135, 7
      %v1137 = vsub.s32 0, %v1136
      %v1138 = vrot.slane %v1084, %v1137
      %v1143 = vunpack.c.l.b16 %v1086
      %v1144 = vunpack.c.l.b16 %v1087
      %v1145 = vunpack.c.l.b16 %v1088
      %v1146 = vunpack.c.l.b16 %v1089
      %v1147 = vpack.c.b16 %v1144, %v1143
      %v1148 = vpack.c.b16 %v1146, %v1145
      %v1152 = vsel %vm585, %v1134, 0
      %1154 = vmatprep.subr.bf16.mxu0 0
      %1155 = vmatpush1.bf16.msra.mxu0 0
      %1156 = vmatprep.subr.bf16.mxu0 0
      %1157 = vmatpush1.bf16.msra.mxu0 0
      %1158 = vmatprep.subr.bf16.mxu0 0
      %1159 = vmatpush1.bf16.msra.mxu0 0
      %1160 = vmatprep.subr.bf16.mxu0 0
      %1161 = vmatpush1.bf16.msra.mxu0 0
      %1162 = vmatprep.subr.bf16.mxu0 0
      %1163 = vmatpush1.bf16.msra.mxu0 0
      %1164 = vmatprep.subr.bf16.mxu0 0
      %1165 = vmatpush1.bf16.msra.mxu0 0
      %1166 = vmatprep.subr.bf16.mxu0 0
      %1167 = vmatpush1.bf16.msra.mxu0 %v1148
      %1168 = vmatprep.subr.bf16.mxu0 0
      %1169 = vmatpush1.bf16.msra.mxu0 %v1147
      %1170 = vmatprep.subr.bf16.mxu0 0
      %1171 = vmatpush2.bf16.msra.mxu0 0
      %1172 = vmatprep.subr.bf16.mxu0 0
      %1173 = vmatpush2.bf16.msra.mxu0 0
      %1174 = vmatprep.subr.bf16.mxu0 0
      %1175 = vmatpush2.bf16.msra.mxu0 0
      %1176 = vmatprep.subr.bf16.mxu0 0
      %1177 = vmatpush2.bf16.msra.mxu0 0
      %1178 = vmatprep.subr.bf16.mxu0 0
      %1179 = vmatpush2.bf16.msra.mxu0 0
      %1180 = vmatprep.subr.bf16.mxu0 0
      %1181 = vmatpush2.bf16.msra.mxu0 0
      %1182 = vmatprep.subr.bf16.mxu0 0
      %1183 = vmatpush2.bf16.msra.mxu0 0
      %1184 = vmatprep.subr.bf16.mxu0 0
      %1185 = vmatpush2.bf16.msra.mxu0 0
      %1186 = vmatprep.mubr.bf16.mxu0 0
      %1187 = vmatmul.mubr.bf16.gmra.mxu0 %v1152
      %v1188 = vpop.f32.mrf.mxu0
      %v1189 = vadd.f32 %v1138, %v1188
      %v1190 = vpop.f32.mrf.mxu0
      %v1191 = vpop.f32.mrf.mxu0
      %v1192 = vadd.f32 %v1138, %v1191
      %v1193 = vpop.f32.mrf.mxu0
      %1194 = vdwg.mxu0
      %v1195 = vsel %vm585, %v1189, 0.0
      %1196 = vadd.xlane.f32.xlu0 %v1195
      %v1197 = vpop.xlane.xlu0 %1196
      %v1198 = vsel %vm585, %v1192, 0.0
      %1199 = vadd.xlane.f32.xlu0 %v1198
      %v1200 = vpop.xlane.xlu0 %1199
      %v1201 = vmul.f32 %v1197, %v636
      %v1202 = vmul.f32 %v1200, %v636
      %v1203 = vmul.f32 %v1189, %v1189
      %v1204 = vmul.f32 %v1192, %v1192
      %v1205 = vsel %vm585, %v1203, 0.0
      %1206 = vadd.xlane.f32.xlu0 %v1205
      %v1207 = vpop.xlane.xlu0 %1206
      %v1208 = vsel %vm585, %v1204, 0.0
      %1209 = vadd.xlane.f32.xlu0 %v1208
      %v1210 = vpop.xlane.xlu0 %1209
      %v1211 = vmul.f32 %v1207, %v636
      %v1212 = vmul.f32 %v1210, %v636
      %v1213 = vmul.f32 %v1201, %v1201
      %v1214 = vmul.f32 %v1202, %v1202
      %v1215 = vsub.f32 %v1211, %v1213
      %v1216 = vsub.f32 %v1212, %v1214
      %v1217 = vsub.f32 %v1189, %v1201
      %v1218 = vsub.f32 %v1192, %v1202
      %v1219 = vadd.f32 %v1215, 1e-05
      %v1220 = vadd.f32 %v1216, 1e-05
      %v1221 = vrsqrt.pop %v1219
      %v1222 = vrsqrt.pop %v1220
      %v1223 = vmul.f32 %v1217, %v1221
      %v1224 = vmul.f32 %v1218, %v1222
      %v1225 = vlaneseq
      %v1226 = vshrl.u32 %v1225, 7
      %v1227 = vsub.s32 1, %v1226
      %v1228 = vrot.slane %v1084, %v1227
      %v1229 = vmul.f32 %v1223, %v1228
      %v1230 = vmul.f32 %v1224, %v1228
      %v1231 = vlaneseq
      %v1232 = vshrl.u32 %v1231, 7
      %v1233 = vsub.s32 2, %v1232
      %v1234 = vrot.slane %v1084, %v1233
      %v1235 = vadd.f32 %v1229, %v1234
      %v1236 = vadd.f32 %v1230, %v1234
      %s1237 = scalar_lea.vmem %s3, 80
      %v1238 = vld [vmem:[%s1237] sm:$0xf]
      %v1239 = vld [vmem:[%s1237 + $0x4] sm:$0xf]
      %v1240 = vld [vmem:[%s1237 + $0x8] sm:$0xf]
      %v1241 = vld [vmem:[%s1237 + $0xc] sm:$0xf]
      %v1242 = vpack.c.bf16 %v1236, %v1235
      %1243 = vmatprep.subr.bf16.mxu0 0
      %1244 = vmatpush1.bf16.msra.mxu0 0
      %1245 = vmatprep.subr.bf16.mxu0 0
      %1246 = vmatpush1.bf16.msra.mxu0 0
      %1247 = vmatprep.subr.bf16.mxu0 0
      %1248 = vmatpush1.bf16.msra.mxu0 0
      %1249 = vmatprep.subr.bf16.mxu0 0
      %1250 = vmatpush1.bf16.msra.mxu0 0
      %1251 = vmatprep.subr.bf16.mxu0 0
      %1252 = vmatpush1.bf16.msra.mxu0 0
      %1253 = vmatprep.subr.bf16.mxu0 0
      %1254 = vmatpush1.bf16.msra.mxu0 0
      %1255 = vmatprep.subr.bf16.mxu0 0
      %1256 = vmatpush1.bf16.msra.mxu0 0
      %1257 = vmatprep.subr.bf16.mxu0 0
      %1258 = vmatpush1.bf16.msra.mxu0 %v1242
      %1259 = vmatprep.subr.bf16.mxu0 0
      %1260 = vmatpush2.bf16.msra.mxu0 0
      %1261 = vmatprep.subr.bf16.mxu0 0
      %1262 = vmatpush2.bf16.msra.mxu0 0
      %1263 = vmatprep.subr.bf16.mxu0 0
      %1264 = vmatpush2.bf16.msra.mxu0 0
      %1265 = vmatprep.subr.bf16.mxu0 0
      %1266 = vmatpush2.bf16.msra.mxu0 0
      %1267 = vmatprep.subr.bf16.mxu0 0
      %1268 = vmatpush2.bf16.msra.mxu0 0
      %1269 = vmatprep.subr.bf16.mxu0 0
      %1270 = vmatpush2.bf16.msra.mxu0 0
      %1271 = vmatprep.subr.bf16.mxu0 0
      %1272 = vmatpush2.bf16.msra.mxu0 0
      %1273 = vmatprep.subr.bf16.mxu0 0
      %1274 = vmatpush2.bf16.msra.mxu0 0
      %1275 = vmatprep.mubr.bf16.mxu0 0
      %1276 = vmatmul.mubr.bf16.gmra.mxu0 %v404
      %v1277 = vpop.f32.mrf.mxu0
      %v1278 = vadd.f32 %v1091, %v1277
      %v1279 = vpop.f32.mrf.mxu0
      %v1280 = vpop.f32.mrf.mxu0
      %v1281 = vadd.f32 %v1092, %v1280
      %v1282 = vpop.f32.mrf.mxu0
      %1283 = vdwg.mxu0
      %v1284 = vpack.c.bf16 %v1281, %v1278
      %v1285 = vlaneseq
      %v1286 = vshrl.u32 %v1285, 7
      %v1287 = vsub.s32 3, %v1286
      %v1288 = vrot.slane %v1084, %v1287
      %v1293 = vunpack.c.l.b16 %v1238
      %v1294 = vunpack.c.l.b16 %v1239
      %v1295 = vunpack.c.l.b16 %v1240
      %v1296 = vunpack.c.l.b16 %v1241
      %v1297 = vpack.c.b16 %v1294, %v1293
      %v1298 = vpack.c.b16 %v1296, %v1295
      %v1302 = vsel %vm585, %v1284, 0
      %1304 = vmatprep.subr.bf16.mxu0 0
      %1305 = vmatpush1.bf16.msra.mxu0 0
      %1306 = vmatprep.subr.bf16.mxu0 0
      %1307 = vmatpush1.bf16.msra.mxu0 0
      %1308 = vmatprep.subr.bf16.mxu0 0
      %1309 = vmatpush1.bf16.msra.mxu0 0
      %1310 = vmatprep.subr.bf16.mxu0 0
      %1311 = vmatpush1.bf16.msra.mxu0 0
      %1312 = vmatprep.subr.bf16.mxu0 0
      %1313 = vmatpush1.bf16.msra.mxu0 0
      %1314 = vmatprep.subr.bf16.mxu0 0
      %1315 = vmatpush1.bf16.msra.mxu0 0
      %1316 = vmatprep.subr.bf16.mxu0 0
      %1317 = vmatpush1.bf16.msra.mxu0 %v1298
      %1318 = vmatprep.subr.bf16.mxu0 0
      %1319 = vmatpush1.bf16.msra.mxu0 %v1297
      %1320 = vmatprep.subr.bf16.mxu0 0
      %1321 = vmatpush2.bf16.msra.mxu0 0
      %1322 = vmatprep.subr.bf16.mxu0 0
      %1323 = vmatpush2.bf16.msra.mxu0 0
      %1324 = vmatprep.subr.bf16.mxu0 0
      %1325 = vmatpush2.bf16.msra.mxu0 0
      %1326 = vmatprep.subr.bf16.mxu0 0
      %1327 = vmatpush2.bf16.msra.mxu0 0
      %1328 = vmatprep.subr.bf16.mxu0 0
      %1329 = vmatpush2.bf16.msra.mxu0 0
      %1330 = vmatprep.subr.bf16.mxu0 0
      %1331 = vmatpush2.bf16.msra.mxu0 0
      %1332 = vmatprep.subr.bf16.mxu0 0
      %1333 = vmatpush2.bf16.msra.mxu0 0
      %1334 = vmatprep.subr.bf16.mxu0 0
      %1335 = vmatpush2.bf16.msra.mxu0 0
      %1336 = vmatprep.mubr.bf16.mxu0 0
      %1337 = vmatmul.mubr.bf16.gmra.mxu0 %v1302
      %v1338 = vpop.f32.mrf.mxu0
      %v1339 = vadd.f32 %v1288, %v1338
      %v1340 = vpop.f32.mrf.mxu0
      %v1341 = vpop.f32.mrf.mxu0
      %v1342 = vadd.f32 %v1288, %v1341
      %v1343 = vpop.f32.mrf.mxu0
      %1344 = vdwg.mxu0
      %v1345 = vmul.f32 %v1339, 0.5
      %v1346 = vmul.f32 %v1342, 0.5
      %v1347 = vmul.f32 %v1339, 0.044715
      %v1348 = vmul.f32 %v1342, 0.044715
      %v1349 = vmul.f32 %v1347, %v1339
      %v1350 = vmul.f32 %v1348, %v1342
      %v1351 = vmul.f32 %v1349, %v1339
      %v1352 = vmul.f32 %v1350, %v1342
      %v1353 = vadd.f32 %v1339, %v1351
      %v1354 = vadd.f32 %v1342, %v1352
      %v1355 = vmul.f32 %v1353, 0.7978846
      %v1356 = vmul.f32 %v1354, 0.7978846
      %v1357 = vtanh.pop %v1355
      %v1358 = vtanh.pop %v1356
      %v1359 = vadd.f32 %v1357, 1.0
      %v1360 = vadd.f32 %v1358, 1.0
      %v1361 = vmul.f32 %v1345, %v1359
      %v1362 = vmul.f32 %v1346, %v1360
      %v1363 = vadd.f32 %v1081, %v1361
      %v1364 = vadd.f32 %v1082, %v1362
      %s1365 = scalar_lea.vmem %s4, 12
      %v1366 = vld [vmem:[%s1365] sm:$0xf]
      %s1367 = scalar_lea.vmem %s3, 96
      %v1368 = vld [vmem:[%s1367] sm:$0xf]
      %v1369 = vld [vmem:[%s1367 + $0x4] sm:$0xf]
      %v1370 = vld [vmem:[%s1367 + $0x8] sm:$0xf]
      %v1371 = vld [vmem:[%s1367 + $0xc] sm:$0xf]
      %v1372 = vpack.c.bf16 %v1364, %v1363
      %v1373 = vmul.f32 %v1363, 0.3
      %v1374 = vmul.f32 %v1364, 0.3
      %1375 = vmatprep.subr.bf16.mxu0 0
      %1376 = vmatpush1.bf16.msra.mxu0 0
      %1377 = vmatprep.subr.bf16.mxu0 0
      %1378 = vmatpush1.bf16.msra.mxu0 0
      %1379 = vmatprep.subr.bf16.mxu0 0
      %1380 = vmatpush1.bf16.msra.mxu0 0
      %1381 = vmatprep.subr.bf16.mxu0 0
      %1382 = vmatpush1.bf16.msra.mxu0 0
      %1383 = vmatprep.subr.bf16.mxu0 0
      %1384 = vmatpush1.bf16.msra.mxu0 0
      %1385 = vmatprep.subr.bf16.mxu0 0
      %1386 = vmatpush1.bf16.msra.mxu0 0
      %1387 = vmatprep.subr.bf16.mxu0 0
      %1388 = vmatpush1.bf16.msra.mxu0 0
      %1389 = vmatprep.subr.bf16.mxu0 0
      %1390 = vmatpush1.bf16.msra.mxu0 %v1372
      %1391 = vmatprep.subr.bf16.mxu0 0
      %1392 = vmatpush2.bf16.msra.mxu0 0
      %1393 = vmatprep.subr.bf16.mxu0 0
      %1394 = vmatpush2.bf16.msra.mxu0 0
      %1395 = vmatprep.subr.bf16.mxu0 0
      %1396 = vmatpush2.bf16.msra.mxu0 0
      %1397 = vmatprep.subr.bf16.mxu0 0
      %1398 = vmatpush2.bf16.msra.mxu0 0
      %1399 = vmatprep.subr.bf16.mxu0 0
      %1400 = vmatpush2.bf16.msra.mxu0 0
      %1401 = vmatprep.subr.bf16.mxu0 0
      %1402 = vmatpush2.bf16.msra.mxu0 0
      %1403 = vmatprep.subr.bf16.mxu0 0
      %1404 = vmatpush2.bf16.msra.mxu0 0
      %1405 = vmatprep.subr.bf16.mxu0 0
      %1406 = vmatpush2.bf16.msra.mxu0 0
      %1407 = vmatprep.mubr.bf16.mxu0 0
      %1408 = vmatmul.mubr.bf16.gmra.mxu0 %v404
      %v1409 = vpop.f32.mrf.mxu0
      %v1410 = vadd.f32 %v1373, %v1409
      %v1411 = vpop.f32.mrf.mxu0
      %v1412 = vpop.f32.mrf.mxu0
      %v1413 = vadd.f32 %v1374, %v1412
      %v1414 = vpop.f32.mrf.mxu0
      %1415 = vdwg.mxu0
      %v1416 = vpack.c.bf16 %v1413, %v1410
      %v1417 = vlaneseq
      %v1418 = vshrl.u32 %v1417, 7
      %v1419 = vsub.s32 0, %v1418
      %v1420 = vrot.slane %v1366, %v1419
      %v1425 = vunpack.c.l.b16 %v1368
      %v1426 = vunpack.c.l.b16 %v1369
      %v1427 = vunpack.c.l.b16 %v1370
      %v1428 = vunpack.c.l.b16 %v1371
      %v1429 = vpack.c.b16 %v1426, %v1425
      %v1430 = vpack.c.b16 %v1428, %v1427
      %v1434 = vsel %vm585, %v1416, 0
      %1436 = vmatprep.subr.bf16.mxu0 0
      %1437 = vmatpush1.bf16.msra.mxu0 0
      %1438 = vmatprep.subr.bf16.mxu0 0
      %1439 = vmatpush1.bf16.msra.mxu0 0
      %1440 = vmatprep.subr.bf16.mxu0 0
      %1441 = vmatpush1.bf16.msra.mxu0 0
      %1442 = vmatprep.subr.bf16.mxu0 0
      %1443 = vmatpush1.bf16.msra.mxu0 0
      %1444 = vmatprep.subr.bf16.mxu0 0
      %1445 = vmatpush1.bf16.msra.mxu0 0
      %1446 = vmatprep.subr.bf16.mxu0 0
      %1447 = vmatpush1.bf16.msra.mxu0 0
      %1448 = vmatprep.subr.bf16.mxu0 0
      %1449 = vmatpush1.bf16.msra.mxu0 %v1430
      %1450 = vmatprep.subr.bf16.mxu0 0
      %1451 = vmatpush1.bf16.msra.mxu0 %v1429
      %1452 = vmatprep.subr.bf16.mxu0 0
      %1453 = vmatpush2.bf16.msra.mxu0 0
      %1454 = vmatprep.subr.bf16.mxu0 0
      %1455 = vmatpush2.bf16.msra.mxu0 0
      %1456 = vmatprep.subr.bf16.mxu0 0
      %1457 = vmatpush2.bf16.msra.mxu0 0
      %1458 = vmatprep.subr.bf16.mxu0 0
      %1459 = vmatpush2.bf16.msra.mxu0 0
      %1460 = vmatprep.subr.bf16.mxu0 0
      %1461 = vmatpush2.bf16.msra.mxu0 0
      %1462 = vmatprep.subr.bf16.mxu0 0
      %1463 = vmatpush2.bf16.msra.mxu0 0
      %1464 = vmatprep.subr.bf16.mxu0 0
      %1465 = vmatpush2.bf16.msra.mxu0 0
      %1466 = vmatprep.subr.bf16.mxu0 0
      %1467 = vmatpush2.bf16.msra.mxu0 0
      %1468 = vmatprep.mubr.bf16.mxu0 0
      %1469 = vmatmul.mubr.bf16.gmra.mxu0 %v1434
      %v1470 = vpop.f32.mrf.mxu0
      %v1471 = vadd.f32 %v1420, %v1470
      %v1472 = vpop.f32.mrf.mxu0
      %v1473 = vpop.f32.mrf.mxu0
      %v1474 = vadd.f32 %v1420, %v1473
      %v1475 = vpop.f32.mrf.mxu0
      %1476 = vdwg.mxu0
      %v1477 = vsel %vm585, %v1471, 0.0
      %1478 = vadd.xlane.f32.xlu0 %v1477
      %v1479 = vpop.xlane.xlu0 %1478
      %v1480 = vsel %vm585, %v1474, 0.0
      %1481 = vadd.xlane.f32.xlu0 %v1480
      %v1482 = vpop.xlane.xlu0 %1481
      %v1483 = vmul.f32 %v1479, %v636
      %v1484 = vmul.f32 %v1482, %v636
      %v1485 = vmul.f32 %v1471, %v1471
      %v1486 = vmul.f32 %v1474, %v1474
      %v1487 = vsel %vm585, %v1485, 0.0
      %1488 = vadd.xlane.f32.xlu0 %v1487
      %v1489 = vpop.xlane.xlu0 %1488
      %v1490 = vsel %vm585, %v1486, 0.0
      %1491 = vadd.xlane.f32.xlu0 %v1490
      %v1492 = vpop.xlane.xlu0 %1491
      %v1493 = vmul.f32 %v1489, %v636
      %v1494 = vmul.f32 %v1492, %v636
      %v1495 = vmul.f32 %v1483, %v1483
      %v1496 = vmul.f32 %v1484, %v1484
      %v1497 = vsub.f32 %v1493, %v1495
      %v1498 = vsub.f32 %v1494, %v1496
      %v1499 = vsub.f32 %v1471, %v1483
      %v1500 = vsub.f32 %v1474, %v1484
      %v1501 = vadd.f32 %v1497, 1e-05
      %v1502 = vadd.f32 %v1498, 1e-05
      %v1503 = vrsqrt.pop %v1501
      %v1504 = vrsqrt.pop %v1502
      %v1505 = vmul.f32 %v1499, %v1503
      %v1506 = vmul.f32 %v1500, %v1504
      %v1507 = vlaneseq
      %v1508 = vshrl.u32 %v1507, 7
      %v1509 = vsub.s32 1, %v1508
      %v1510 = vrot.slane %v1366, %v1509
      %v1511 = vmul.f32 %v1505, %v1510
      %v1512 = vmul.f32 %v1506, %v1510
      %v1513 = vlaneseq
      %v1514 = vshrl.u32 %v1513, 7
      %v1515 = vsub.s32 2, %v1514
      %v1516 = vrot.slane %v1366, %v1515
      %v1517 = vadd.f32 %v1511, %v1516
      %v1518 = vadd.f32 %v1512, %v1516
      %s1519 = scalar_lea.vmem %s3, 112
      %v1520 = vld [vmem:[%s1519] sm:$0xf]
      %v1521 = vld [vmem:[%s1519 + $0x4] sm:$0xf]
      %v1522 = vld [vmem:[%s1519 + $0x8] sm:$0xf]
      %v1523 = vld [vmem:[%s1519 + $0xc] sm:$0xf]
      %v1524 = vpack.c.bf16 %v1518, %v1517
      %1525 = vmatprep.subr.bf16.mxu0 0
      %1526 = vmatpush1.bf16.msra.mxu0 0
      %1527 = vmatprep.subr.bf16.mxu0 0
      %1528 = vmatpush1.bf16.msra.mxu0 0
      %1529 = vmatprep.subr.bf16.mxu0 0
      %1530 = vmatpush1.bf16.msra.mxu0 0
      %1531 = vmatprep.subr.bf16.mxu0 0
      %1532 = vmatpush1.bf16.msra.mxu0 0
      %1533 = vmatprep.subr.bf16.mxu0 0
      %1534 = vmatpush1.bf16.msra.mxu0 0
      %1535 = vmatprep.subr.bf16.mxu0 0
      %1536 = vmatpush1.bf16.msra.mxu0 0
      %1537 = vmatprep.subr.bf16.mxu0 0
      %1538 = vmatpush1.bf16.msra.mxu0 0
      %1539 = vmatprep.subr.bf16.mxu0 0
      %1540 = vmatpush1.bf16.msra.mxu0 %v1524
      %1541 = vmatprep.subr.bf16.mxu0 0
      %1542 = vmatpush2.bf16.msra.mxu0 0
      %1543 = vmatprep.subr.bf16.mxu0 0
      %1544 = vmatpush2.bf16.msra.mxu0 0
      %1545 = vmatprep.subr.bf16.mxu0 0
      %1546 = vmatpush2.bf16.msra.mxu0 0
      %1547 = vmatprep.subr.bf16.mxu0 0
      %1548 = vmatpush2.bf16.msra.mxu0 0
      %1549 = vmatprep.subr.bf16.mxu0 0
      %1550 = vmatpush2.bf16.msra.mxu0 0
      %1551 = vmatprep.subr.bf16.mxu0 0
      %1552 = vmatpush2.bf16.msra.mxu0 0
      %1553 = vmatprep.subr.bf16.mxu0 0
      %1554 = vmatpush2.bf16.msra.mxu0 0
      %1555 = vmatprep.subr.bf16.mxu0 0
      %1556 = vmatpush2.bf16.msra.mxu0 0
      %1557 = vmatprep.mubr.bf16.mxu0 0
      %1558 = vmatmul.mubr.bf16.gmra.mxu0 %v404
      %v1559 = vpop.f32.mrf.mxu0
      %v1560 = vadd.f32 %v1373, %v1559
      %v1561 = vpop.f32.mrf.mxu0
      %v1562 = vpop.f32.mrf.mxu0
      %v1563 = vadd.f32 %v1374, %v1562
      %v1564 = vpop.f32.mrf.mxu0
      %1565 = vdwg.mxu0
      %v1566 = vpack.c.bf16 %v1563, %v1560
      %v1567 = vlaneseq
      %v1568 = vshrl.u32 %v1567, 7
      %v1569 = vsub.s32 3, %v1568
      %v1570 = vrot.slane %v1366, %v1569
      %v1575 = vunpack.c.l.b16 %v1520
      %v1576 = vunpack.c.l.b16 %v1521
      %v1577 = vunpack.c.l.b16 %v1522
      %v1578 = vunpack.c.l.b16 %v1523
      %v1579 = vpack.c.b16 %v1576, %v1575
      %v1580 = vpack.c.b16 %v1578, %v1577
      %v1584 = vsel %vm585, %v1566, 0
      %1586 = vmatprep.subr.bf16.mxu0 0
      %1587 = vmatpush1.bf16.msra.mxu0 0
      %1588 = vmatprep.subr.bf16.mxu0 0
      %1589 = vmatpush1.bf16.msra.mxu0 0
      %1590 = vmatprep.subr.bf16.mxu0 0
      %1591 = vmatpush1.bf16.msra.mxu0 0
      %1592 = vmatprep.subr.bf16.mxu0 0
      %1593 = vmatpush1.bf16.msra.mxu0 0
      %1594 = vmatprep.subr.bf16.mxu0 0
      %1595 = vmatpush1.bf16.msra.mxu0 0
      %1596 = vmatprep.subr.bf16.mxu0 0
      %1597 = vmatpush1.bf16.msra.mxu0 0
      %1598 = vmatprep.subr.bf16.mxu0 0
      %1599 = vmatpush1.bf16.msra.mxu0 %v1580
      %1600 = vmatprep.subr.bf16.mxu0 0
      %1601 = vmatpush1.bf16.msra.mxu0 %v1579
      %1602 = vmatprep.subr.bf16.mxu0 0
      %1603 = vmatpush2.bf16.msra.mxu0 0
      %1604 = vmatprep.subr.bf16.mxu0 0
      %1605 = vmatpush2.bf16.msra.mxu0 0
      %1606 = vmatprep.subr.bf16.mxu0 0
      %1607 = vmatpush2.bf16.msra.mxu0 0
      %1608 = vmatprep.subr.bf16.mxu0 0
      %1609 = vmatpush2.bf16.msra.mxu0 0
      %1610 = vmatprep.subr.bf16.mxu0 0
      %1611 = vmatpush2.bf16.msra.mxu0 0
      %1612 = vmatprep.subr.bf16.mxu0 0
      %1613 = vmatpush2.bf16.msra.mxu0 0
      %1614 = vmatprep.subr.bf16.mxu0 0
      %1615 = vmatpush2.bf16.msra.mxu0 0
      %1616 = vmatprep.subr.bf16.mxu0 0
      %1617 = vmatpush2.bf16.msra.mxu0 0
      %1618 = vmatprep.mubr.bf16.mxu0 0
      %1619 = vmatmul.mubr.bf16.gmra.mxu0 %v1584
      %v1620 = vpop.f32.mrf.mxu0
      %v1621 = vadd.f32 %v1570, %v1620
      %v1622 = vpop.f32.mrf.mxu0
      %v1623 = vpop.f32.mrf.mxu0
      %v1624 = vadd.f32 %v1570, %v1623
      %v1625 = vpop.f32.mrf.mxu0
      %1626 = vdwg.mxu0
      %v1627 = vmul.f32 %v1621, 0.5
      %v1628 = vmul.f32 %v1624, 0.5
      %v1629 = vmul.f32 %v1621, 0.044715
      %v1630 = vmul.f32 %v1624, 0.044715
      %v1631 = vmul.f32 %v1629, %v1621
      %v1632 = vmul.f32 %v1630, %v1624
      %v1633 = vmul.f32 %v1631, %v1621
      %v1634 = vmul.f32 %v1632, %v1624
      %v1635 = vadd.f32 %v1621, %v1633
      %v1636 = vadd.f32 %v1624, %v1634
      %v1637 = vmul.f32 %v1635, 0.7978846
      %v1638 = vmul.f32 %v1636, 0.7978846
      %v1639 = vtanh.pop %v1637
      %v1640 = vtanh.pop %v1638
      %v1641 = vadd.f32 %v1639, 1.0
      %v1642 = vadd.f32 %v1640, 1.0
      %v1643 = vmul.f32 %v1627, %v1641
      %v1644 = vmul.f32 %v1628, %v1642
      %v1645 = vadd.f32 %v1363, %v1643
      %v1646 = vadd.f32 %v1364, %v1644
      %v1647 = vld [vmem:[%s6] sm:$0x7]
      %v1648 = vpack.c.bf16 %v1646, %v1645
      %v1649 = vld [vmem:[%s5] sm:$0xf]
      %v1650 = vld [vmem:[%s5 + $0x4] sm:$0xf]
      %v1651 = vld [vmem:[%s5 + $0x8] sm:$0xf]
      %v1652 = vld [vmem:[%s5 + $0xc] sm:$0xf]
      %v1653 = vlaneseq
      %v1654 = vshrl.u32 %v1653, 7
      %v1655 = vsub.s32 0, %v1654
      %v1656 = vrot.slane %v1647, %v1655
      %v1661 = vunpack.c.l.b16 %v1649
      %v1662 = vunpack.c.l.b16 %v1650
      %v1663 = vunpack.c.l.b16 %v1651
      %v1664 = vunpack.c.l.b16 %v1652
      %v1665 = vpack.c.b16 %v1662, %v1661
      %v1666 = vpack.c.b16 %v1664, %v1663
      %v1670 = vsel %vm585, %v1648, 0
      %1672 = vmatprep.subr.bf16.mxu0 0
      %1673 = vmatpush1.bf16.msra.mxu0 0
      %1674 = vmatprep.subr.bf16.mxu0 0
      %1675 = vmatpush1.bf16.msra.mxu0 0
      %1676 = vmatprep.subr.bf16.mxu0 0
      %1677 = vmatpush1.bf16.msra.mxu0 0
      %1678 = vmatprep.subr.bf16.mxu0 0
      %1679 = vmatpush1.bf16.msra.mxu0 0
      %1680 = vmatprep.subr.bf16.mxu0 0
      %1681 = vmatpush1.bf16.msra.mxu0 0
      %1682 = vmatprep.subr.bf16.mxu0 0
      %1683 = vmatpush1.bf16.msra.mxu0 0
      %1684 = vmatprep.subr.bf16.mxu0 0
      %1685 = vmatpush1.bf16.msra.mxu0 %v1666
      %1686 = vmatprep.subr.bf16.mxu0 0
      %1687 = vmatpush1.bf16.msra.mxu0 %v1665
      %1688 = vmatprep.subr.bf16.mxu0 0
      %1689 = vmatpush2.bf16.msra.mxu0 0
      %1690 = vmatprep.subr.bf16.mxu0 0
      %1691 = vmatpush2.bf16.msra.mxu0 0
      %1692 = vmatprep.subr.bf16.mxu0 0
      %1693 = vmatpush2.bf16.msra.mxu0 0
      %1694 = vmatprep.subr.bf16.mxu0 0
      %1695 = vmatpush2.bf16.msra.mxu0 0
      %1696 = vmatprep.subr.bf16.mxu0 0
      %1697 = vmatpush2.bf16.msra.mxu0 0
      %1698 = vmatprep.subr.bf16.mxu0 0
      %1699 = vmatpush2.bf16.msra.mxu0 0
      %1700 = vmatprep.subr.bf16.mxu0 0
      %1701 = vmatpush2.bf16.msra.mxu0 0
      %1702 = vmatprep.subr.bf16.mxu0 0
      %1703 = vmatpush2.bf16.msra.mxu0 0
      %1704 = vmatprep.mubr.bf16.mxu0 0
      %1705 = vmatmul.mubr.bf16.gmra.mxu0 %v1670
      %v1706 = vpop.f32.mrf.mxu0
      %v1707 = vadd.f32 %v1656, %v1706
      %v1708 = vpop.f32.mrf.mxu0
      %v1709 = vpop.f32.mrf.mxu0
      %v1710 = vadd.f32 %v1656, %v1709
      %v1711 = vpop.f32.mrf.mxu0
      %1712 = vdwg.mxu0
      %s1713 = scalar_lea.vmem %s5, 16
      %v1714 = vld [vmem:[%s1713] sm:$0xf]
      %v1715 = vld [vmem:[%s1713 + $0x4] sm:$0xf]
      %v1716 = vld [vmem:[%s1713 + $0x8] sm:$0xf]
      %v1717 = vld [vmem:[%s1713 + $0xc] sm:$0xf]
      %v1718 = vlaneseq
      %v1719 = vshrl.u32 %v1718, 7
      %v1720 = vsub.s32 1, %v1719
      %v1721 = vrot.slane %v1647, %v1720
      %v1726 = vunpack.c.l.b16 %v1714
      %v1727 = vunpack.c.l.b16 %v1715
      %v1728 = vunpack.c.l.b16 %v1716
      %v1729 = vunpack.c.l.b16 %v1717
      %v1730 = vpack.c.b16 %v1727, %v1726
      %v1731 = vpack.c.b16 %v1729, %v1728
      %1734 = vmatprep.subr.bf16.mxu0 0
      %1735 = vmatpush1.bf16.msra.mxu0 0
      %1736 = vmatprep.subr.bf16.mxu0 0
      %1737 = vmatpush1.bf16.msra.mxu0 0
      %1738 = vmatprep.subr.bf16.mxu0 0
      %1739 = vmatpush1.bf16.msra.mxu0 0
      %1740 = vmatprep.subr.bf16.mxu0 0
      %1741 = vmatpush1.bf16.msra.mxu0 0
      %1742 = vmatprep.subr.bf16.mxu0 0
      %1743 = vmatpush1.bf16.msra.mxu0 0
      %1744 = vmatprep.subr.bf16.mxu0 0
      %1745 = vmatpush1.bf16.msra.mxu0 0
      %1746 = vmatprep.subr.bf16.mxu0 0
      %1747 = vmatpush1.bf16.msra.mxu0 %v1731
      %1748 = vmatprep.subr.bf16.mxu0 0
      %1749 = vmatpush1.bf16.msra.mxu0 %v1730
      %1750 = vmatprep.subr.bf16.mxu0 0
      %1751 = vmatpush2.bf16.msra.mxu0 0
      %1752 = vmatprep.subr.bf16.mxu0 0
      %1753 = vmatpush2.bf16.msra.mxu0 0
      %1754 = vmatprep.subr.bf16.mxu0 0
      %1755 = vmatpush2.bf16.msra.mxu0 0
      %1756 = vmatprep.subr.bf16.mxu0 0
      %1757 = vmatpush2.bf16.msra.mxu0 0
      %1758 = vmatprep.subr.bf16.mxu0 0
      %1759 = vmatpush2.bf16.msra.mxu0 0
      %1760 = vmatprep.subr.bf16.mxu0 0
      %1761 = vmatpush2.bf16.msra.mxu0 0
      %1762 = vmatprep.subr.bf16.mxu0 0
      %1763 = vmatpush2.bf16.msra.mxu0 0
      %1764 = vmatprep.subr.bf16.mxu0 0
      %1765 = vmatpush2.bf16.msra.mxu0 0
      %1766 = vmatprep.mubr.bf16.mxu0 0
      %1767 = vmatmul.mubr.bf16.gmra.mxu0 %v1670
      %v1768 = vpop.f32.mrf.mxu0
      %v1769 = vadd.f32 %v1721, %v1768
      %v1770 = vpop.f32.mrf.mxu0
      %v1771 = vpop.f32.mrf.mxu0
      %v1772 = vadd.f32 %v1721, %v1771
      %v1773 = vpop.f32.mrf.mxu0
      %1774 = vdwg.mxu0
      %s1775 = scalar_lea.vmem %s5, 32
      %v1776 = vld [vmem:[%s1775] sm:$0xf]
      %v1777 = vld [vmem:[%s1775 + $0x4] sm:$0xf]
      %v1778 = vld [vmem:[%s1775 + $0x8] sm:$0xf]
      %v1779 = vld [vmem:[%s1775 + $0xc] sm:$0xf]
      %v1780 = vlaneseq
      %v1781 = vshrl.u32 %v1780, 7
      %v1782 = vsub.s32 2, %v1781
      %v1783 = vrot.slane %v1647, %v1782
      %v1788 = vunpack.c.l.b16 %v1776
      %v1789 = vunpack.c.l.b16 %v1777
      %v1790 = vunpack.c.l.b16 %v1778
      %v1791 = vunpack.c.l.b16 %v1779
      %v1792 = vpack.c.b16 %v1789, %v1788
      %v1793 = vpack.c.b16 %v1791, %v1790
      %1796 = vmatprep.subr.bf16.mxu0 0
      %1797 = vmatpush1.bf16.msra.mxu0 0
      %1798 = vmatprep.subr.bf16.mxu0 0
      %1799 = vmatpush1.bf16.msra.mxu0 0
      %1800 = vmatprep.subr.bf16.mxu0 0
      %1801 = vmatpush1.bf16.msra.mxu0 0
      %1802 = vmatprep.subr.bf16.mxu0 0
      %1803 = vmatpush1.bf16.msra.mxu0 0
      %1804 = vmatprep.subr.bf16.mxu0 0
      %1805 = vmatpush1.bf16.msra.mxu0 0
      %1806 = vmatprep.subr.bf16.mxu0 0
      %1807 = vmatpush1.bf16.msra.mxu0 0
      %1808 = vmatprep.subr.bf16.mxu0 0
      %1809 = vmatpush1.bf16.msra.mxu0 %v1793
      %1810 = vmatprep.subr.bf16.mxu0 0
      %1811 = vmatpush1.bf16.msra.mxu0 %v1792
      %1812 = vmatprep.subr.bf16.mxu0 0
      %1813 = vmatpush2.bf16.msra.mxu0 0
      %1814 = vmatprep.subr.bf16.mxu0 0
      %1815 = vmatpush2.bf16.msra.mxu0 0
      %1816 = vmatprep.subr.bf16.mxu0 0
      %1817 = vmatpush2.bf16.msra.mxu0 0
      %1818 = vmatprep.subr.bf16.mxu0 0
      %1819 = vmatpush2.bf16.msra.mxu0 0
      %1820 = vmatprep.subr.bf16.mxu0 0
      %1821 = vmatpush2.bf16.msra.mxu0 0
      %1822 = vmatprep.subr.bf16.mxu0 0
      %1823 = vmatpush2.bf16.msra.mxu0 0
      %1824 = vmatprep.subr.bf16.mxu0 0
      %1825 = vmatpush2.bf16.msra.mxu0 0
      %1826 = vmatprep.subr.bf16.mxu0 0
      %1827 = vmatpush2.bf16.msra.mxu0 0
      %1828 = vmatprep.mubr.bf16.mxu0 0
      %1829 = vmatmul.mubr.bf16.gmra.mxu0 %v1670
      %v1830 = vpop.f32.mrf.mxu0
      %v1831 = vadd.f32 %v1783, %v1830
      %v1832 = vpop.f32.mrf.mxu0
      %v1833 = vpop.f32.mrf.mxu0
      %v1834 = vadd.f32 %v1783, %v1833
      %v1835 = vpop.f32.mrf.mxu0
      %1836 = vdwg.mxu0
      %v1837 = vpack.c.bf16 %v1710, %v1707
      %v1838 = vpack.c.bf16 %v1772, %v1769
      %v1839 = vpack.c.bf16 %v1834, %v1831
      %v1841 = vsel %vm402, %v1838, 0
      %v1844 = vsel %vm402, %v1839, 0
      %1846 = vmatprep.subr.bf16.mxu0 0
      %1847 = vmatpush1.bf16.xpose.msra.mxu0 0
      %1848 = vmatprep.subr.bf16.mxu0 0
      %1849 = vmatpush1.bf16.xpose.msra.mxu0 0
      %1850 = vmatprep.subr.bf16.mxu0 0
      %1851 = vmatpush1.bf16.xpose.msra.mxu0 0
      %1852 = vmatprep.subr.bf16.mxu0 0
      %1853 = vmatpush1.bf16.xpose.msra.mxu0 0
      %1854 = vmatprep.subr.bf16.mxu0 0
      %1855 = vmatpush1.bf16.xpose.msra.mxu0 0
      %1856 = vmatprep.subr.bf16.mxu0 0
      %1857 = vmatpush1.bf16.xpose.msra.mxu0 0
      %1858 = vmatprep.subr.bf16.mxu0 0
      %1859 = vmatpush1.bf16.xpose.msra.mxu0 0
      %1860 = vmatprep.subr.bf16.mxu0 0
      %1861 = vmatpush1.bf16.xpose.msra.mxu0 %v1844
      %1862 = vmatprep.subr.bf16.mxu0 0
      %1863 = vmatpush2.bf16.xpose.msra.mxu0 0
      %1864 = vmatprep.subr.bf16.mxu0 0
      %1865 = vmatpush2.bf16.xpose.msra.mxu0 0
      %1866 = vmatprep.subr.bf16.mxu0 0
      %1867 = vmatpush2.bf16.xpose.msra.mxu0 0
      %1868 = vmatprep.subr.bf16.mxu0 0
      %1869 = vmatpush2.bf16.xpose.msra.mxu0 0
      %1870 = vmatprep.subr.bf16.mxu0 0
      %1871 = vmatpush2.bf16.xpose.msra.mxu0 0
      %1872 = vmatprep.subr.bf16.mxu0 0
      %1873 = vmatpush2.bf16.xpose.msra.mxu0 0
      %1874 = vmatprep.subr.bf16.mxu0 0
      %1875 = vmatpush2.bf16.xpose.msra.mxu0 0
      %1876 = vmatprep.subr.bf16.mxu0 0
      %1877 = vmatpush2.bf16.xpose.msra.mxu0 0
      %1878 = vmatprep.mubr.bf16.mxu0 0
      %1879 = vmatmul.mubr.bf16.gmra.mxu0 %v1841
      %v1880 = vpop.f32.mrf.mxu0
      %v1881 = vadd.f32 0.0, %v1880
      %v1882 = vpop.f32.mrf.mxu0
      %v1883 = vpop.f32.mrf.mxu0
      %v1884 = vadd.f32 0.0, %v1883
      %v1885 = vpop.f32.mrf.mxu0
      %1886 = vdwg.mxu0
      %v1887 = vsel %vm402, %v1881, -inf
      %1888 = vmax.xlane.f32.xlu0 %v1887
      %v1889 = vpop.xlane.xlu0 %1888
      %v1890 = vsel %vm402, %v1884, -inf
      %1891 = vmax.xlane.f32.xlu0 %v1890
      %v1892 = vpop.xlane.xlu0 %1891
      %v1893 = vsub.f32 %v1881, %v1889
      %v1894 = vsub.f32 %v1884, %v1892
      %v1895 = vmul.f32 %v1893, 1.442695
      %v1896 = vpow.pop %v1895
      %v1897 = vmul.f32 %v1894, 1.442695
      %v1898 = vpow.pop %v1897
      %v1899 = vsel %vm402, %v1896, 0.0
      %1900 = vadd.xlane.f32.xlu0 %v1899
      %v1901 = vpop.xlane.xlu0 %1900
      %v1902 = vsel %vm402, %v1898, 0.0
      %1903 = vadd.xlane.f32.xlu0 %v1902
      %v1904 = vpop.xlane.xlu0 %1903
      %v1905 = vrcp.pop %v1901
      %v1906 = vrcp.pop %v1904
      %v1907 = vmul.f32 %v1896, %v1905
      %v1908 = vmul.f32 %v1898, %v1906
      %v1909 = vpack.c.bf16 %v1908, %v1907
      %v1911 = vsel %vm402, %v1909, 0
      %1913 = vmatprep.subr.bf16.mxu0 0
      %1914 = vmatpush1.bf16.msra.mxu0 0
      %1915 = vmatprep.subr.bf16.mxu0 0
      %1916 = vmatpush1.bf16.msra.mxu0 0
      %1917 = vmatprep.subr.bf16.mxu0 0
      %1918 = vmatpush1.bf16.msra.mxu0 0
      %1919 = vmatprep.subr.bf16.mxu0 0
      %1920 = vmatpush1.bf16.msra.mxu0 0
      %1921 = vmatprep.subr.bf16.mxu0 0
      %1922 = vmatpush1.bf16.msra.mxu0 0
      %1923 = vmatprep.subr.bf16.mxu0 0
      %1924 = vmatpush1.bf16.msra.mxu0 0
      %1925 = vmatprep.subr.bf16.mxu0 0
      %1926 = vmatpush1.bf16.msra.mxu0 0
      %1927 = vmatprep.subr.bf16.mxu0 0
      %1928 = vmatpush1.bf16.msra.mxu0 %v1837
      %1929 = vmatprep.subr.bf16.mxu0 0
      %1930 = vmatpush2.bf16.msra.mxu0 0
      %1931 = vmatprep.subr.bf16.mxu0 0
      %1932 = vmatpush2.bf16.msra.mxu0 0
      %1933 = vmatprep.subr.bf16.mxu0 0
      %1934 = vmatpush2.bf16.msra.mxu0 0
      %1935 = vmatprep.subr.bf16.mxu0 0
      %1936 = vmatpush2.bf16.msra.mxu0 0
      %1937 = vmatprep.subr.bf16.mxu0 0
      %1938 = vmatpush2.bf16.msra.mxu0 0
      %1939 = vmatprep.subr.bf16.mxu0 0
      %1940 = vmatpush2.bf16.msra.mxu0 0
      %1941 = vmatprep.subr.bf16.mxu0 0
      %1942 = vmatpush2.bf16.msra.mxu0 0
      %1943 = vmatprep.subr.bf16.mxu0 0
      %1944 = vmatpush2.bf16.msra.mxu0 0
      %1945 = vmatprep.mubr.bf16.mxu0 0
      %1946 = vmatmul.mubr.bf16.gmra.mxu0 %v1911
      %v1947 = vpop.f32.mrf.mxu0
      %v1948 = vadd.f32 0.0, %v1947
      %v1949 = vpop.f32.mrf.mxu0
      %v1950 = vpop.f32.mrf.mxu0
      %v1951 = vadd.f32 0.0, %v1950
      %v1952 = vpop.f32.mrf.mxu0
      %1953 = vdwg.mxu0
      %v1954 = vpack.c.bf16 %v1951, %v1948
      %v1955 = vld [vmem:[%s7] sm:$0xf]
      %v1956 = vld [vmem:[%s7 + $0x4] sm:$0xf]
      %v1959 = vunpack.c.l.b16 %v1955
      %v1960 = vunpack.c.l.b16 %v1956
      %v1961 = vpack.c.b16 %v1960, %v1959
      %v1964 = vsel %vm402, %v1954, 0
      %1966 = vmatprep.subr.bf16.mxu0 0
      %1967 = vmatpush1.bf16.msra.mxu0 0
      %1968 = vmatprep.subr.bf16.mxu0 0
      %1969 = vmatpush1.bf16.msra.mxu0 0
      %1970 = vmatprep.subr.bf16.mxu0 0
      %1971 = vmatpush1.bf16.msra.mxu0 0
      %1972 = vmatprep.subr.bf16.mxu0 0
      %1973 = vmatpush1.bf16.msra.mxu0 0
      %1974 = vmatprep.subr.bf16.mxu0 0
      %1975 = vmatpush1.bf16.msra.mxu0 0
      %1976 = vmatprep.subr.bf16.mxu0 0
      %1977 = vmatpush1.bf16.msra.mxu0 0
      %1978 = vmatprep.subr.bf16.mxu0 0
      %1979 = vmatpush1.bf16.msra.mxu0 0
      %1980 = vmatprep.subr.bf16.mxu0 0
      %1981 = vmatpush1.bf16.msra.mxu0 %v1961
      %1982 = vmatprep.subr.bf16.mxu0 0
      %1983 = vmatpush2.bf16.msra.mxu0 0
      %1984 = vmatprep.subr.bf16.mxu0 0
      %1985 = vmatpush2.bf16.msra.mxu0 0
      %1986 = vmatprep.subr.bf16.mxu0 0
      %1987 = vmatpush2.bf16.msra.mxu0 0
      %1988 = vmatprep.subr.bf16.mxu0 0
      %1989 = vmatpush2.bf16.msra.mxu0 0
      %1990 = vmatprep.subr.bf16.mxu0 0
      %1991 = vmatpush2.bf16.msra.mxu0 0
      %1992 = vmatprep.subr.bf16.mxu0 0
      %1993 = vmatpush2.bf16.msra.mxu0 0
      %1994 = vmatprep.subr.bf16.mxu0 0
      %1995 = vmatpush2.bf16.msra.mxu0 0
      %1996 = vmatprep.subr.bf16.mxu0 0
      %1997 = vmatpush2.bf16.msra.mxu0 0
      %1998 = vmatprep.mubr.bf16.mxu0 0
      %1999 = vmatmul.mubr.bf16.gmra.mxu0 %v1964
      %v2000 = vpop.f32.mrf.mxu0
      %v2001 = vadd.f32 0.0, %v2000
      %v2002 = vpop.f32.mrf.mxu0
      %v2003 = vpop.f32.mrf.mxu0
      %v2004 = vadd.f32 0.0, %v2003
      %v2005 = vpop.f32.mrf.mxu0
      %2006 = vdwg.mxu0
      %v2007 = vlaneseq
      %v2008 = vshrl.u32 %v2007, 7
      %v2009 = vsub.s32 1, %v2008
      %v2010 = vrot.slane %v390, %v2009
      %v2011 = vmul.f32 %v2001, %v2010
      %v2012 = vmul.f32 %v2004, %v2010
      %v2013 = vlaneseq
      %v2014 = vshrl.u32 %v2013, 7
      %v2015 = vsub.s32 2, %v2014
      %v2016 = vrot.slane %v390, %v2015
      %v2017 = vadd.f32 %v2011, %v2016
      %v2018 = vadd.f32 %v2012, %v2016
      %v2019 = vadd.f32 %v2017, %v1645
      %v2020 = vadd.f32 %v2018, %v1646
      %v2021 = vld [vmem:[%s9] sm:$0xf]
      %v2022 = vld [vmem:[%s9 + $0x4] sm:$0xf]
      %v2023 = vld [vmem:[%s9 + $0x8] sm:$0xf]
      %v2024 = vld [vmem:[%s9 + $0xc] sm:$0xf]
      %v2025 = vld [vmem:[%s10] sm:$0x1]
      %v2026 = vpack.c.bf16 %v2020, %v2019
      %2027 = vmatprep.subr.bf16.mxu0 0
      %2028 = vmatpush1.bf16.msra.mxu0 0
      %2029 = vmatprep.subr.bf16.mxu0 0
      %2030 = vmatpush1.bf16.msra.mxu0 0
      %2031 = vmatprep.subr.bf16.mxu0 0
      %2032 = vmatpush1.bf16.msra.mxu0 0
      %2033 = vmatprep.subr.bf16.mxu0 0
      %2034 = vmatpush1.bf16.msra.mxu0 0
      %2035 = vmatprep.subr.bf16.mxu0 0
      %2036 = vmatpush1.bf16.msra.mxu0 0
      %2037 = vmatprep.subr.bf16.mxu0 0
      %2038 = vmatpush1.bf16.msra.mxu0 0
      %2039 = vmatprep.subr.bf16.mxu0 0
      %2040 = vmatpush1.bf16.msra.mxu0 0
      %2041 = vmatprep.subr.bf16.mxu0 0
      %2042 = vmatpush1.bf16.msra.mxu0 %v2026
      %2043 = vmatprep.subr.bf16.mxu0 0
      %2044 = vmatpush2.bf16.msra.mxu0 0
      %2045 = vmatprep.subr.bf16.mxu0 0
      %2046 = vmatpush2.bf16.msra.mxu0 0
      %2047 = vmatprep.subr.bf16.mxu0 0
      %2048 = vmatpush2.bf16.msra.mxu0 0
      %2049 = vmatprep.subr.bf16.mxu0 0
      %2050 = vmatpush2.bf16.msra.mxu0 0
      %2051 = vmatprep.subr.bf16.mxu0 0
      %2052 = vmatpush2.bf16.msra.mxu0 0
      %2053 = vmatprep.subr.bf16.mxu0 0
      %2054 = vmatpush2.bf16.msra.mxu0 0
      %2055 = vmatprep.subr.bf16.mxu0 0
      %2056 = vmatpush2.bf16.msra.mxu0 0
      %2057 = vmatprep.subr.bf16.mxu0 0
      %2058 = vmatpush2.bf16.msra.mxu0 0
      %2059 = vmatprep.mubr.bf16.mxu0 0
      %2060 = vmatmul.mubr.bf16.gmra.mxu0 %v404
      %v2061 = vpop.f32.mrf.mxu0
      %v2062 = vadd.f32 %v525, %v2061
      %v2063 = vpop.f32.mrf.mxu0
      %v2064 = vpop.f32.mrf.mxu0
      %v2065 = vadd.f32 %v526, %v2064
      %v2066 = vpop.f32.mrf.mxu0
      %2067 = vdwg.mxu0
      %v2068 = vpack.c.bf16 %v2065, %v2062
      %v2070 = vlaneseq
      %v2071 = vshrl.u32 %v2070, 7
      %v2072 = vsub.s32 0, %v2071
      %v2073 = vrot.slane %v2025, %v2072
      %v2079 = vunpack.c.l.b16 %v2021
      %v2080 = vunpack.c.l.b16 %v2022
      %v2081 = vunpack.c.l.b16 %v2023
      %v2082 = vunpack.c.l.b16 %v2024
      %v2083 = vpack.c.b16 %v2080, %v2079
      %v2084 = vpack.c.b16 %v2082, %v2081
      %v2088 = vsel %vm585, %v2068, 0
      %2090 = vmatprep.subr.bf16.mxu0 0
      %2091 = vmatpush1.bf16.msra.mxu0 0
      %2092 = vmatprep.subr.bf16.mxu0 0
      %2093 = vmatpush1.bf16.msra.mxu0 0
      %2094 = vmatprep.subr.bf16.mxu0 0
      %2095 = vmatpush1.bf16.msra.mxu0 0
      %2096 = vmatprep.subr.bf16.mxu0 0
      %2097 = vmatpush1.bf16.msra.mxu0 0
      %2098 = vmatprep.subr.bf16.mxu0 0
      %2099 = vmatpush1.bf16.msra.mxu0 0
      %2100 = vmatprep.subr.bf16.mxu0 0
      %2101 = vmatpush1.bf16.msra.mxu0 0
      %2102 = vmatprep.subr.bf16.mxu0 0
      %2103 = vmatpush1.bf16.msra.mxu0 %v2084
      %2104 = vmatprep.subr.bf16.mxu0 0
      %2105 = vmatpush1.bf16.msra.mxu0 %v2083
      %2106 = vmatprep.subr.bf16.mxu0 0
      %2107 = vmatpush2.bf16.msra.mxu0 0
      %2108 = vmatprep.subr.bf16.mxu0 0
      %2109 = vmatpush2.bf16.msra.mxu0 0
      %2110 = vmatprep.subr.bf16.mxu0 0
      %2111 = vmatpush2.bf16.msra.mxu0 0
      %2112 = vmatprep.subr.bf16.mxu0 0
      %2113 = vmatpush2.bf16.msra.mxu0 0
      %2114 = vmatprep.subr.bf16.mxu0 0
      %2115 = vmatpush2.bf16.msra.mxu0 0
      %2116 = vmatprep.subr.bf16.mxu0 0
      %2117 = vmatpush2.bf16.msra.mxu0 0
      %2118 = vmatprep.subr.bf16.mxu0 0
      %2119 = vmatpush2.bf16.msra.mxu0 0
      %2120 = vmatprep.subr.bf16.mxu0 0
      %2121 = vmatpush2.bf16.msra.mxu0 0
      %2122 = vmatprep.mubr.bf16.mxu0 0
      %2123 = vmatmul.mubr.bf16.gmra.mxu0 %v2088
      %v2124 = vpop.f32.mrf.mxu0
      %v2125 = vadd.f32 %v2073, %v2124
      %v2126 = vpop.f32.mrf.mxu0
      %v2127 = vpop.f32.mrf.mxu0
      %v2128 = vadd.f32 %v2073, %v2127
      %v2129 = vpop.f32.mrf.mxu0
      %2130 = vdwg.mxu0
      %2131 = vst [vmem:[%s386] sm:$0xff] %v2125
      %2132 = vst [vmem:[%s386 + $0x8] sm:$0xff] %v2128
      %p2133 = scmp.lt.s32.totalorder %s22, 1
      %s2134 = scalar_select %p2133, %s22, 1
      %s2135 = smul.addr %s2134, 2
      %s2136 = smul.addr %s2135, 8
      %s2137 = scalar_lea.vmem %s11, %s2136
      // Predicated region
      $region65: #{gsnet_gcn_forward.1} parent=63 // pred_check
        %p2138 = pneg %p276
      $region66: #{gsnet_gcn_forward.1} parent=63 // pred_check_branch
        %2140 = sbr.rel (%p2138) target = $region68
      $region67: #{gsnet_gcn_forward.1} parent=63 // pred_region
        _
      $region68: #{gsnet_gcn_forward.1} parent=63 // pred_fallthru
        _
    $region64: #{gsnet_gcn_forward.1} parent=5 // pred_fallthru
      _
    %p2141 = scmp.le.s32.totalorder 2, %s17
    // Predicated region
    $region69: #{gsnet_gcn_forward.1} parent=5 // pred_check
      %p2142 = pneg %p2141
    $region70: #{gsnet_gcn_forward.1} parent=5 // pred_check_branch
      %2144 = sbr.rel (%p2142) target = $region72
    $region71: #{gsnet_gcn_forward.1} parent=5 // pred_region
      %s2145 = ssub.s32 %s17, 2
      // Predicated region
      $region73: #{gsnet_gcn_forward.1} parent=71 // pred_check
        %p2146 = pneg %p282
      $region74: #{gsnet_gcn_forward.1} parent=71 // pred_check_branch
        %2148 = sbr.rel (%p2146) target = $region76
      $region75: #{gsnet_gcn_forward.1} parent=71 // pred_region
        %p2149 = scmp.lt.s32.totalorder %s23, 1
        %s2150 = scalar_select %p2149, %s23, 1
        %s2151 = smul.addr %s2150, 2
        %s2152 = smul.addr %s2151, 8
        %s2153 = scalar_lea.vmem %s11, %s2152
      $region76: #{gsnet_gcn_forward.1} parent=71 // pred_fallthru
        _
    $region72: #{gsnet_gcn_forward.1} parent=5 // pred_fallthru
      _
  $region6: #{gsnet_gcn_forward.1} parent=0 // loop_footer
    %s21 = sadd.s32 1, %s17
  $region7: #{gsnet_gcn_forward.1} parent=0 // loop_footer_branch
    %16 = sbr.rel target = $region3
  $region8: #{gsnet_gcn_forward.1} parent=0 // loop_exit
    _

</llo_original>
